<compile_context>
chip_gen: v7x
topology: tpu7x:2x2x1
jax: 0.10.0
libtpu: 0.0.40
codegen_flags: <defaults>
</compile_context>

<pallas_src>
import functools

import jax
import jax.numpy as jnp
import numpy as np
from jax.experimental import pallas as pl
from jax.experimental.pallas import tpu as pltpu

EPS = 1e-5                      # PyTorch nn.LayerNorm default eps
INV_SQRT2 = 0.7071067811865476  # for exact (erf) GELU


def block_kernel(x_ref, ln1_w, ln1_b, qkv_w, qkv_b, proj_w, proj_b,
                 ln2_w, ln2_b, fc1_w, fc1_b, fc2_w, fc2_b, g1, g2,
                 o_ref, *, num_heads, head_dim, batch_block, seq_len,
                 matmul_dtype, exact_gelu):
    """Fused Block forward for `batch_block` batch elements per grid step."""
    C = num_heads * head_dim
    rows = batch_block * seq_len
    bh = batch_block * num_heads
    f32_matmul = jnp.dtype(matmul_dtype) == jnp.dtype(jnp.float32)

    # Residual / elementwise math stays f32 regardless of matmul dtype.
    x = x_ref[...].astype(jnp.float32).reshape(rows, C)

    def layernorm(z, w_ref, b_ref):
        # One-pass stats: E[x], E[x^2] -> half the XLU reduction passes per LN.
        mu = jnp.mean(z, axis=-1, keepdims=True)
        ms = jnp.mean(z * z, axis=-1, keepdims=True)
        var = ms - mu * mu
        return (z - mu) * jax.lax.rsqrt(var + EPS) * w_ref[...] + b_ref[...]

    def matmul(a, w_ref, b_ref):
        # bf16/f32 MXU inputs, f32 accumulation, f32 bias add.
        return jnp.dot(a.astype(matmul_dtype), w_ref[...].astype(matmul_dtype),
                       preferred_element_type=jnp.float32) + b_ref[...]

    # ---- LayerNorm 1 + fused QKV projection --------------------------------
    # (1/sqrt(head_dim) is already folded into the q columns of qkv_w / qkv_b)
    xn = layernorm(x, ln1_w, ln1_b)
    qkv = matmul(xn, qkv_w, qkv_b)                        # (rows, 3C), f32

    # ---- multi-head self-attention, batched over batch_block * heads -------
    def heads(z2d):                                       # (rows, C)->(b*H, N, d)
        z = z2d.reshape(batch_block, seq_len, num_heads, head_dim)
        z = pltpu.einshape("bnhd->bhnd", z)
        return z.reshape(bh, seq_len, head_dim)

    qh = heads(qkv[:, 0:C])
    kh = heads(qkv[:, C:2 * C])
    vh = heads(qkv[:, 2 * C:3 * C])

    s = jnp.einsum("bqd,bkd->bqk",
                   qh.astype(matmul_dtype), kh.astype(matmul_dtype),
                   preferred_element_type=jnp.float32)    # (b*H, N, N)
    s = s - jnp.max(s, axis=-1, keepdims=True)
    p = jnp.exp(s)
    l = jnp.sum(p, axis=-1, keepdims=True)                # (b*H, N, 1)
    ctx = jnp.einsum("bqk,bkd->bqd",
                     p.astype(matmul_dtype), vh.astype(matmul_dtype),
                     preferred_element_type=jnp.float32)  # (b*H, N, d)
    # Deferred softmax normalization: exact on the f32 path (tight reference
    # check), EUP approximate reciprocal on the bf16 deployment path.
    if f32_matmul:
        ctx = ctx / l
    else:
        ctx = ctx * pl.reciprocal(l, approx=True)
    ctx = ctx.reshape(batch_block, num_heads, seq_len, head_dim)
    ctx = pltpu.einshape("bhnd->bnhd", ctx).reshape(rows, C)

    # ---- output projection + layer-scale residual ---------------------------
    x1 = x + g1[...] * matmul(ctx, proj_w, proj_b)

    # ---- LayerNorm 2 + MLP (fc1 -> GELU -> fc2) + layer-scale residual ------
    xn2 = layernorm(x1, ln2_w, ln2_b)
    h = matmul(xn2, fc1_w, fc1_b)
    if exact_gelu:
        # matches PyTorch nn.GELU() default (erf form)
        h = 0.5 * h * (1.0 + jax.lax.erf(h * INV_SQRT2))
    else:
        # tanh approximation runs on the otherwise-idle EUP (opt-in)
        h = jax.nn.gelu(h, approximate=True)
    h = matmul(h, fc2_w, fc2_b)
    out = x1 + g2[...] * h

    o_ref[...] = out.reshape(batch_block, seq_len, C).astype(o_ref.dtype)
    # NOTE: dropout / DropPath are identity here (drop probs 0.0 / eval mode).


def prepare_params(params, num_heads, matmul_dtype=jnp.float32):
    """One-time parameter prep: fold the 1/sqrt(head_dim) attention scale into
    the Q columns of the fused QKV weight/bias and cast the large matmul
    weights to the MXU dtype. Biases / LN params / gammas stay f32."""
    C = params["qkv_w"].shape[0]
    head_dim = C // num_heads
    scale = head_dim ** -0.5
    p = dict(params)
    p["qkv_w"] = params["qkv_w"].at[:, :C].multiply(scale).astype(matmul_dtype)
    p["qkv_b"] = params["qkv_b"].at[:, :C].multiply(scale)
    for k in ("proj_w", "fc1_w", "fc2_w"):
        p[k] = params[k].astype(matmul_dtype)
    return p


def _vmem_budget_bytes():
    """Generation-aware VMEM limit (~13/16 of physical, capped)."""
    try:
        info = pltpu.get_tpu_info()
        cap = getattr(info, "vmem_capacity_bytes", 64 * 1024 * 1024)
    except Exception:
        cap = 64 * 1024 * 1024          # conservative (v7x-sized) fallback
    return min(int(cap) * 13 // 16, 112 * 1024 * 1024)


def transformer_block(x, params, num_heads, *, matmul_dtype=jnp.float32,
                      batch_block=None, exact_gelu=True):
    """params must come from prepare_params (scale folded, weights cast)."""
    B, N, C = x.shape
    head_dim = C // num_heads
    Hdim = params["fc1_w"].shape[1]
    mm_bytes = jnp.dtype(matmul_dtype).itemsize
    io_bytes = jnp.dtype(x.dtype).itemsize

    vmem_limit = _vmem_budget_bytes()
    weight_bytes = ((C * 3 * C + C * C + C * Hdim + Hdim * C) * mm_bytes
                    + (3 * C + 10 * C + Hdim) * 4)

    def step_vmem_bytes(bb):
        rows = bb * N
        io = 2 * 2 * bb * N * C * io_bytes               # x + out, double-buffered
        acts = 4 * rows * (6 * C + 3 * C + Hdim)         # rough f32 activations
        scores = 4 * bb * num_heads * N * N * 2          # s + p, f32
        return io + weight_bytes + acts + scores

    if batch_block is None:
        budget = int(0.7 * vmem_limit)
        # keep grid >= 2 so the "parallel" batch axis can shard across the
        # two TensorCores on v7x (harmless serial loop on v5e/v6e)
        cands = [bb for bb in range(B, 0, -1)
                 if B % bb == 0 and (B < 2 or B // bb >= 2)]
        batch_block = next((bb for bb in cands if step_vmem_bytes(bb) <= budget),
                           cands[-1])
    assert B % batch_block == 0

    kernel = functools.partial(
        block_kernel, num_heads=num_heads, head_dim=head_dim,
        batch_block=batch_block, seq_len=N, matmul_dtype=matmul_dtype,
        exact_gelu=exact_gelu)

    # Grid-invariant (weight) blocks: whole array, single-buffered -> no
    # pointless second pipeline buffer for data that never changes.
    def wspec(shape):
        return pl.BlockSpec(shape, lambda b: (0,) * len(shape),
                            pipeline_mode=pl.Buffered(1))

    in_specs = [
        pl.BlockSpec((batch_block, N, C), lambda b: (b, 0, 0)),   # x
        wspec((1, C)), wspec((1, C)),                             # ln1 w, b
        wspec((C, 3 * C)), wspec((1, 3 * C)),                     # qkv w, b
        wspec((C, C)), wspec((1, C)),                             # proj w, b
        wspec((1, C)), wspec((1, C)),                             # ln2 w, b
        wspec((C, Hdim)), wspec((1, Hdim)),                       # fc1 w, b
        wspec((Hdim, C)), wspec((1, C)),                          # fc2 w, b
        wspec((1, C)), wspec((1, C)),                             # gamma_1, gamma_2
    ]

    flops = int(2 * B * N * C * (3 * C)                  # qkv
                + 4 * B * num_heads * N * N * head_dim   # q@k^T + p@v
                + 2 * B * N * C * C                      # proj
                + 4 * B * N * C * Hdim)                  # fc1 + fc2
    transcendentals = int(B * num_heads * N * N + B * N * Hdim)
    bytes_accessed = int(2 * B * N * C * io_bytes + weight_bytes)

    return pl.pallas_call(
        kernel,
        out_shape=jax.ShapeDtypeStruct((B, N, C), x.dtype),
        grid_spec=pltpu.PrefetchScalarGridSpec(
            num_scalar_prefetch=0,
            grid=(B // batch_block,),
            in_specs=in_specs,
            out_specs=pl.BlockSpec((batch_block, N, C), lambda b: (b, 0, 0)),
        ),
        compiler_params=pltpu.CompilerParams(
            # batch axis is fully independent -> shard across TCs on v7x
            dimension_semantics=("parallel",),
            vmem_limit_bytes=vmem_limit,
        ),
        cost_estimate=pl.CostEstimate(flops=flops,
                                      transcendentals=transcendentals,
                                      bytes_accessed=bytes_accessed),
    )(x, params["ln1_w"], params["ln1_b"], params["qkv_w"], params["qkv_b"],
      params["proj_w"], params["proj_b"], params["ln2_w"], params["ln2_b"],
      params["fc1_w"], params["fc1_b"], params["fc2_w"], params["fc2_b"],
      params["g1"], params["g2"])


def ref_block(x, p, num_heads):
    """Pure-JAX reference reproducing the PyTorch Block forward (raw params)."""
    B, N, C = x.shape
    D = C // num_heads

    def ln(z, w, b):
        mu = jnp.mean(z, -1, keepdims=True)
        var = jnp.mean((z - mu) ** 2, -1, keepdims=True)
        return (z - mu) / jnp.sqrt(var + EPS) * w[0] + b[0]

    xn = ln(x, p["ln1_w"], p["ln1_b"])
    qkv = xn @ p["qkv_w"] + p["qkv_b"][0]
    qkv = qkv.reshape(B, N, 3, num_heads, D).transpose(2, 0, 3, 1, 4)
    q, k, v = qkv[0] * D ** -0.5, qkv[1], qkv[2]
    attn = jax.nn.softmax(q @ jnp.swapaxes(k, -2, -1), axis=-1)
    o = (attn @ v).transpose(0, 2, 1, 3).reshape(B, N, C)
    o = o @ p["proj_w"] + p["proj_b"][0]
    x1 = x + p["g1"][0] * o

    xn2 = ln(x1, p["ln2_w"], p["ln2_b"])
    h = xn2 @ p["fc1_w"] + p["fc1_b"][0]
    h = jax.nn.gelu(h, approximate=False)
    h = h @ p["fc2_w"] + p["fc2_b"][0]
    return x1 + p["g2"][0] * h


if __name__ == "__main__":
    # Block(dim=32, num_heads=4, mlp_ratio=4.0, qkv_bias=True, init_values=0.1)
    B, N, C, num_heads = 2, 8, 32, 4
    H = int(C * 4.0)
    init_values = 0.1

    ks = jax.random.split(jax.random.PRNGKey(0), 9)
    params = {
        "ln1_w": jnp.ones((1, C), jnp.float32),
        "ln1_b": jnp.zeros((1, C), jnp.float32),
        "qkv_w": 0.02 * jax.random.normal(ks[0], (C, 3 * C), jnp.float32),
        "qkv_b": 0.02 * jax.random.normal(ks[1], (1, 3 * C), jnp.float32),
        "proj_w": 0.02 * jax.random.normal(ks[2], (C, C), jnp.float32),
        "proj_b": 0.02 * jax.random.normal(ks[3], (1, C), jnp.float32),
        "ln2_w": jnp.ones((1, C), jnp.float32),
        "ln2_b": jnp.zeros((1, C), jnp.float32),
        "fc1_w": 0.02 * jax.random.normal(ks[4], (C, H), jnp.float32),
        "fc1_b": 0.02 * jax.random.normal(ks[5], (1, H), jnp.float32),
        "fc2_w": 0.02 * jax.random.normal(ks[6], (H, C), jnp.float32),
        "fc2_b": 0.02 * jax.random.normal(ks[7], (1, C), jnp.float32),
        "g1": jnp.full((1, C), init_values, jnp.float32),
        "g2": jnp.full((1, C), init_values, jnp.float32),
    }
    x = jax.random.normal(ks[8], (B, N, C), jnp.float32)

    ref = ref_block(x, params, num_heads)

    # f32 MXU path: tight check against the PyTorch-equivalent reference.
    out_f32 = jax.block_until_ready(
        transformer_block(x, prepare_params(params, num_heads, jnp.float32),
                          num_heads, matmul_dtype=jnp.float32))
    np.testing.assert_allclose(np.asarray(out_f32), np.asarray(ref),
                               rtol=1e-4, atol=1e-4)

    # bf16 MXU path (deployment config on v6e/v7x): looser tolerance.
    out_bf16 = jax.block_until_ready(
        transformer_block(x, prepare_params(params, num_heads, jnp.bfloat16),
                          num_heads, matmul_dtype=jnp.bfloat16))
    np.testing.assert_allclose(np.asarray(out_bf16), np.asarray(ref),
                               rtol=2e-2, atol=2e-2)

    print("KERNEL_OK")
</pallas_src>

<mosaic_0001>
module attributes {stable_mosaic.version = 11 : i64} {
  func.func @block_kernel(%arg0: i32, %arg1: memref<1x8x32xf32, #tpu.memory_space<vmem>>, %arg2: memref<1x32xf32, #tpu.memory_space<vmem>>, %arg3: memref<1x32xf32, #tpu.memory_space<vmem>>, %arg4: memref<32x96xf32, #tpu.memory_space<vmem>>, %arg5: memref<1x96xf32, #tpu.memory_space<vmem>>, %arg6: memref<32x32xf32, #tpu.memory_space<vmem>>, %arg7: memref<1x32xf32, #tpu.memory_space<vmem>>, %arg8: memref<1x32xf32, #tpu.memory_space<vmem>>, %arg9: memref<1x32xf32, #tpu.memory_space<vmem>>, %arg10: memref<32x128xf32, #tpu.memory_space<vmem>>, %arg11: memref<1x128xf32, #tpu.memory_space<vmem>>, %arg12: memref<128x32xf32, #tpu.memory_space<vmem>>, %arg13: memref<1x32xf32, #tpu.memory_space<vmem>>, %arg14: memref<1x32xf32, #tpu.memory_space<vmem>>, %arg15: memref<1x32xf32, #tpu.memory_space<vmem>>, %arg16: memref<1x8x32xf32, #tpu.memory_space<vmem>>) attributes {dimension_semantics = [#tpu.dimension_semantics<parallel>], iteration_bounds = array<i64: 2>, scalar_prefetch = 0 : i64, scratch_operands = 0 : i64, tpu.core_type = #tpu.core_type<tc>, window_params = [{transform_indices = @transform_0, window_bounds = array<i64: 1, 8, 32>}, {pipeline_mode = #tpu.pipeline_mode<synchronous>, transform_indices = @transform_1, window_bounds = array<i64: 1, 32>}, {pipeline_mode = #tpu.pipeline_mode<synchronous>, transform_indices = @transform_2, window_bounds = array<i64: 1, 32>}, {pipeline_mode = #tpu.pipeline_mode<synchronous>, transform_indices = @transform_3, window_bounds = array<i64: 32, 96>}, {pipeline_mode = #tpu.pipeline_mode<synchronous>, transform_indices = @transform_4, window_bounds = array<i64: 1, 96>}, {pipeline_mode = #tpu.pipeline_mode<synchronous>, transform_indices = @transform_5, window_bounds = array<i64: 32, 32>}, {pipeline_mode = #tpu.pipeline_mode<synchronous>, transform_indices = @transform_6, window_bounds = array<i64: 1, 32>}, {pipeline_mode = #tpu.pipeline_mode<synchronous>, transform_indices = @transform_7, window_bounds = array<i64: 1, 32>}, {pipeline_mode = #tpu.pipeline_mode<synchronous>, transform_indices = @transform_8, window_bounds = array<i64: 1, 32>}, {pipeline_mode = #tpu.pipeline_mode<synchronous>, transform_indices = @transform_9, window_bounds = array<i64: 32, 128>}, {pipeline_mode = #tpu.pipeline_mode<synchronous>, transform_indices = @transform_10, window_bounds = array<i64: 1, 128>}, {pipeline_mode = #tpu.pipeline_mode<synchronous>, transform_indices = @transform_11, window_bounds = array<i64: 128, 32>}, {pipeline_mode = #tpu.pipeline_mode<synchronous>, transform_indices = @transform_12, window_bounds = array<i64: 1, 32>}, {pipeline_mode = #tpu.pipeline_mode<synchronous>, transform_indices = @transform_13, window_bounds = array<i64: 1, 32>}, {pipeline_mode = #tpu.pipeline_mode<synchronous>, transform_indices = @transform_14, window_bounds = array<i64: 1, 32>}, {transform_indices = @transform_15, window_bounds = array<i64: 1, 8, 32>}]} {
    %c0 = arith.constant 0 : index
    %c0_0 = arith.constant 0 : index
    %c0_1 = arith.constant 0 : index
    %0 = vector.load %arg1[%c0, %c0_0, %c0_1] : memref<1x8x32xf32, #tpu.memory_space<vmem>>, vector<1x8x32xf32>
    %1 = vector.shape_cast %0 : vector<1x8x32xf32> to vector<8x32xf32>
    %cst = arith.constant dense<0.000000e+00> : vector<8xf32>
    %2 = vector.multi_reduction <add>, %1, %cst [1] : vector<8x32xf32> to vector<8xf32>
    %3 = vector.shape_cast %2 : vector<8xf32> to vector<8x1xf32>
    %cst_2 = arith.constant 3.200000e+01 : f32
    %4 = vector.broadcast %cst_2 : f32 to vector<8x1xf32>
    %5 = arith.divf %3, %4 : vector<8x1xf32>
    %6 = arith.mulf %1, %1 : vector<8x32xf32>
    %cst_3 = arith.constant dense<0.000000e+00> : vector<8xf32>
    %7 = vector.multi_reduction <add>, %6, %cst_3 [1] : vector<8x32xf32> to vector<8xf32>
    %8 = vector.shape_cast %7 : vector<8xf32> to vector<8x1xf32>
    %cst_4 = arith.constant 3.200000e+01 : f32
    %9 = vector.broadcast %cst_4 : f32 to vector<8x1xf32>
    %10 = arith.divf %8, %9 : vector<8x1xf32>
    %11 = arith.mulf %5, %5 : vector<8x1xf32>
    %12 = arith.subf %10, %11 : vector<8x1xf32>
    %13 = vector.broadcast %5 : vector<8x1xf32> to vector<8x32xf32>
    %14 = arith.subf %1, %13 : vector<8x32xf32>
    %cst_5 = arith.constant 9.99999974E-6 : f32
    %15 = vector.broadcast %cst_5 : f32 to vector<8x1xf32>
    %16 = arith.addf %12, %15 : vector<8x1xf32>
    %17 = math.rsqrt %16 : vector<8x1xf32>
    %18 = vector.broadcast %17 : vector<8x1xf32> to vector<8x32xf32>
    %19 = arith.mulf %14, %18 : vector<8x32xf32>
    %c0_6 = arith.constant 0 : index
    %c0_7 = arith.constant 0 : index
    %20 = vector.load %arg2[%c0_6, %c0_7] : memref<1x32xf32, #tpu.memory_space<vmem>>, vector<1x32xf32>
    %21 = vector.broadcast %20 : vector<1x32xf32> to vector<8x32xf32>
    %22 = arith.mulf %19, %21 : vector<8x32xf32>
    %c0_8 = arith.constant 0 : index
    %c0_9 = arith.constant 0 : index
    %23 = vector.load %arg3[%c0_8, %c0_9] : memref<1x32xf32, #tpu.memory_space<vmem>>, vector<1x32xf32>
    %24 = vector.broadcast %23 : vector<1x32xf32> to vector<8x32xf32>
    %25 = arith.addf %22, %24 : vector<8x32xf32>
    %c0_10 = arith.constant 0 : index
    %c0_11 = arith.constant 0 : index
    %26 = vector.load %arg4[%c0_10, %c0_11] : memref<32x96xf32, #tpu.memory_space<vmem>>, vector<32x96xf32>
    %cst_12 = arith.constant dense<0.000000e+00> : vector<8x96xf32>
    %27 = tpu.matmul %25, %26, %cst_12 {dimension_numbers = #tpu.dot_dimension_numbers<[1], [0], [0], [1], [0, 0, 1, 1], [], []>} : vector<8x32xf32>, vector<32x96xf32>, vector<8x96xf32> -> vector<8x96xf32>
    %c0_13 = arith.constant 0 : index
    %c0_14 = arith.constant 0 : index
    %28 = vector.load %arg5[%c0_13, %c0_14] : memref<1x96xf32, #tpu.memory_space<vmem>>, vector<1x96xf32>
    %29 = vector.broadcast %28 : vector<1x96xf32> to vector<8x96xf32>
    %30 = arith.addf %27, %29 : vector<8x96xf32>
    %31 = vector.extract_strided_slice %30 {offsets = [0, 0], sizes = [8, 32], strides = [1, 1]} : vector<8x96xf32> to vector<8x32xf32>
    %32 = vector.shape_cast %31 : vector<8x32xf32> to vector<1x8x4x8xf32>
    %33 = tpu.transpose %32, [0, 2, 1, 3] : vector<1x8x4x8xf32> -> vector<1x4x8x8xf32>
    %34 = vector.shape_cast %33 : vector<1x4x8x8xf32> to vector<4x8x8xf32>
    %35 = vector.extract_strided_slice %30 {offsets = [0, 32], sizes = [8, 32], strides = [1, 1]} : vector<8x96xf32> to vector<8x32xf32>
    %36 = vector.shape_cast %35 : vector<8x32xf32> to vector<1x8x4x8xf32>
    %37 = tpu.transpose %36, [0, 2, 1, 3] : vector<1x8x4x8xf32> -> vector<1x4x8x8xf32>
    %38 = vector.shape_cast %37 : vector<1x4x8x8xf32> to vector<4x8x8xf32>
    %39 = vector.extract_strided_slice %30 {offsets = [0, 64], sizes = [8, 32], strides = [1, 1]} : vector<8x96xf32> to vector<8x32xf32>
    %40 = vector.shape_cast %39 : vector<8x32xf32> to vector<1x8x4x8xf32>
    %41 = tpu.transpose %40, [0, 2, 1, 3] : vector<1x8x4x8xf32> -> vector<1x4x8x8xf32>
    %42 = vector.shape_cast %41 : vector<1x4x8x8xf32> to vector<4x8x8xf32>
    "tpu.trace_start"() <{level = 10 : i32, message = "bqd,bkd->bqk"}> : () -> ()
    %cst_15 = arith.constant dense<0.000000e+00> : vector<4x8x8xf32>
    %43 = tpu.matmul %34, %38, %cst_15 {dimension_numbers = #tpu.dot_dimension_numbers<[2], [2], [1], [1], [0, 0, 0, 1, 1, 1], [0], [0]>} : vector<4x8x8xf32>, vector<4x8x8xf32>, vector<4x8x8xf32> -> vector<4x8x8xf32>
    "tpu.trace_stop"() : () -> ()
    %cst_16 = arith.constant dense<0xFF800000> : vector<4x8xf32>
    %44 = vector.multi_reduction <maximumf>, %43, %cst_16 [2] : vector<4x8x8xf32> to vector<4x8xf32>
    %45 = vector.shape_cast %44 : vector<4x8xf32> to vector<4x8x1xf32>
    %46 = vector.broadcast %45 : vector<4x8x1xf32> to vector<4x8x8xf32>
    %47 = arith.subf %43, %46 : vector<4x8x8xf32>
    %48 = math.exp %47 : vector<4x8x8xf32>
    %cst_17 = arith.constant dense<0.000000e+00> : vector<4x8xf32>
    %49 = vector.multi_reduction <add>, %48, %cst_17 [2] : vector<4x8x8xf32> to vector<4x8xf32>
    %50 = vector.shape_cast %49 : vector<4x8xf32> to vector<4x8x1xf32>
    "tpu.trace_start"() <{level = 10 : i32, message = "bqk,bkd->bqd"}> : () -> ()
    %cst_18 = arith.constant dense<0.000000e+00> : vector<4x8x8xf32>
    %51 = tpu.matmul %48, %42, %cst_18 {dimension_numbers = #tpu.dot_dimension_numbers<[2], [1], [1], [2], [0, 0, 0, 1, 1, 2], [0], [0]>} : vector<4x8x8xf32>, vector<4x8x8xf32>, vector<4x8x8xf32> -> vector<4x8x8xf32>
    "tpu.trace_stop"() : () -> ()
    %52 = vector.broadcast %50 : vector<4x8x1xf32> to vector<4x8x8xf32>
    %53 = arith.divf %51, %52 : vector<4x8x8xf32>
    %54 = vector.shape_cast %53 : vector<4x8x8xf32> to vector<1x4x8x8xf32>
    %55 = tpu.transpose %54, [0, 2, 1, 3] : vector<1x4x8x8xf32> -> vector<1x8x4x8xf32>
    %56 = vector.shape_cast %55 : vector<1x8x4x8xf32> to vector<8x32xf32>
    %c0_19 = arith.constant 0 : index
    %c0_20 = arith.constant 0 : index
    %57 = vector.load %arg14[%c0_19, %c0_20] : memref<1x32xf32, #tpu.memory_space<vmem>>, vector<1x32xf32>
    %c0_21 = arith.constant 0 : index
    %c0_22 = arith.constant 0 : index
    %58 = vector.load %arg6[%c0_21, %c0_22] : memref<32x32xf32, #tpu.memory_space<vmem>>, vector<32x32xf32>
    %cst_23 = arith.constant dense<0.000000e+00> : vector<8x32xf32>
    %59 = tpu.matmul %56, %58, %cst_23 {dimension_numbers = #tpu.dot_dimension_numbers<[1], [0], [0], [1], [0, 0, 1, 1], [], []>} : vector<8x32xf32>, vector<32x32xf32>, vector<8x32xf32> -> vector<8x32xf32>
    %c0_24 = arith.constant 0 : index
    %c0_25 = arith.constant 0 : index
    %60 = vector.load %arg7[%c0_24, %c0_25] : memref<1x32xf32, #tpu.memory_space<vmem>>, vector<1x32xf32>
    %61 = vector.broadcast %60 : vector<1x32xf32> to vector<8x32xf32>
    %62 = arith.addf %59, %61 : vector<8x32xf32>
    %63 = vector.broadcast %57 : vector<1x32xf32> to vector<8x32xf32>
    %64 = arith.mulf %63, %62 : vector<8x32xf32>
    %65 = arith.addf %1, %64 : vector<8x32xf32>
    %cst_26 = arith.constant dense<0.000000e+00> : vector<8xf32>
    %66 = vector.multi_reduction <add>, %65, %cst_26 [1] : vector<8x32xf32> to vector<8xf32>
    %67 = vector.shape_cast %66 : vector<8xf32> to vector<8x1xf32>
    %cst_27 = arith.constant 3.200000e+01 : f32
    %68 = vector.broadcast %cst_27 : f32 to vector<8x1xf32>
    %69 = arith.divf %67, %68 : vector<8x1xf32>
    %70 = arith.mulf %65, %65 : vector<8x32xf32>
    %cst_28 = arith.constant dense<0.000000e+00> : vector<8xf32>
    %71 = vector.multi_reduction <add>, %70, %cst_28 [1] : vector<8x32xf32> to vector<8xf32>
    %72 = vector.shape_cast %71 : vector<8xf32> to vector<8x1xf32>
    %cst_29 = arith.constant 3.200000e+01 : f32
    %73 = vector.broadcast %cst_29 : f32 to vector<8x1xf32>
    %74 = arith.divf %72, %73 : vector<8x1xf32>
    %75 = arith.mulf %69, %69 : vector<8x1xf32>
    %76 = arith.subf %74, %75 : vector<8x1xf32>
    %77 = vector.broadcast %69 : vector<8x1xf32> to vector<8x32xf32>
    %78 = arith.subf %65, %77 : vector<8x32xf32>
    %cst_30 = arith.constant 9.99999974E-6 : f32
    %79 = vector.broadcast %cst_30 : f32 to vector<8x1xf32>
    %80 = arith.addf %76, %79 : vector<8x1xf32>
    %81 = math.rsqrt %80 : vector<8x1xf32>
    %82 = vector.broadcast %81 : vector<8x1xf32> to vector<8x32xf32>
    %83 = arith.mulf %78, %82 : vector<8x32xf32>
    %c0_31 = arith.constant 0 : index
    %c0_32 = arith.constant 0 : index
    %84 = vector.load %arg8[%c0_31, %c0_32] : memref<1x32xf32, #tpu.memory_space<vmem>>, vector<1x32xf32>
    %85 = vector.broadcast %84 : vector<1x32xf32> to vector<8x32xf32>
    %86 = arith.mulf %83, %85 : vector<8x32xf32>
    %c0_33 = arith.constant 0 : index
    %c0_34 = arith.constant 0 : index
    %87 = vector.load %arg9[%c0_33, %c0_34] : memref<1x32xf32, #tpu.memory_space<vmem>>, vector<1x32xf32>
    %88 = vector.broadcast %87 : vector<1x32xf32> to vector<8x32xf32>
    %89 = arith.addf %86, %88 : vector<8x32xf32>
    %c0_35 = arith.constant 0 : index
    %c0_36 = arith.constant 0 : index
    %90 = vector.load %arg10[%c0_35, %c0_36] : memref<32x128xf32, #tpu.memory_space<vmem>>, vector<32x128xf32>
    %cst_37 = arith.constant dense<0.000000e+00> : vector<8x128xf32>
    %91 = tpu.matmul %89, %90, %cst_37 {dimension_numbers = #tpu.dot_dimension_numbers<[1], [0], [0], [1], [0, 0, 1, 1], [], []>} : vector<8x32xf32>, vector<32x128xf32>, vector<8x128xf32> -> vector<8x128xf32>
    %c0_38 = arith.constant 0 : index
    %c0_39 = arith.constant 0 : index
    %92 = vector.load %arg11[%c0_38, %c0_39] : memref<1x128xf32, #tpu.memory_space<vmem>>, vector<1x128xf32>
    %93 = vector.broadcast %92 : vector<1x128xf32> to vector<8x128xf32>
    %94 = arith.addf %91, %93 : vector<8x128xf32>
    %cst_40 = arith.constant 5.000000e-01 : f32
    %95 = vector.broadcast %cst_40 : f32 to vector<8x128xf32>
    %96 = arith.mulf %95, %94 : vector<8x128xf32>
    %cst_41 = arith.constant 0.707106769 : f32
    %97 = vector.broadcast %cst_41 : f32 to vector<8x128xf32>
    %98 = arith.mulf %94, %97 : vector<8x128xf32>
    %99 = math.erf %98 : vector<8x128xf32>
    %cst_42 = arith.constant 1.000000e+00 : f32
    %100 = vector.broadcast %cst_42 : f32 to vector<8x128xf32>
    %101 = arith.addf %100, %99 : vector<8x128xf32>
    %102 = arith.mulf %96, %101 : vector<8x128xf32>
    %c0_43 = arith.constant 0 : index
    %c0_44 = arith.constant 0 : index
    %103 = vector.load %arg12[%c0_43, %c0_44] : memref<128x32xf32, #tpu.memory_space<vmem>>, vector<128x32xf32>
    %cst_45 = arith.constant dense<0.000000e+00> : vector<8x32xf32>
    %104 = tpu.matmul %102, %103, %cst_45 {dimension_numbers = #tpu.dot_dimension_numbers<[1], [0], [0], [1], [0, 0, 1, 1], [], []>} : vector<8x128xf32>, vector<128x32xf32>, vector<8x32xf32> -> vector<8x32xf32>
    %c0_46 = arith.constant 0 : index
    %c0_47 = arith.constant 0 : index
    %105 = vector.load %arg13[%c0_46, %c0_47] : memref<1x32xf32, #tpu.memory_space<vmem>>, vector<1x32xf32>
    %106 = vector.broadcast %105 : vector<1x32xf32> to vector<8x32xf32>
    %107 = arith.addf %104, %106 : vector<8x32xf32>
    %c0_48 = arith.constant 0 : index
    %c0_49 = arith.constant 0 : index
    %108 = vector.load %arg15[%c0_48, %c0_49] : memref<1x32xf32, #tpu.memory_space<vmem>>, vector<1x32xf32>
    %109 = vector.broadcast %108 : vector<1x32xf32> to vector<8x32xf32>
    %110 = arith.mulf %109, %107 : vector<8x32xf32>
    %111 = arith.addf %65, %110 : vector<8x32xf32>
    %112 = vector.shape_cast %111 : vector<8x32xf32> to vector<1x8x32xf32>
    %c0_50 = arith.constant 0 : index
    %c0_51 = arith.constant 0 : index
    %c0_52 = arith.constant 0 : index
    %113 = vector.load %arg16[%c0_50, %c0_51, %c0_52] : memref<1x8x32xf32, #tpu.memory_space<vmem>>, vector<1x8x32xf32>
    tpu.vector_store %arg16[%c0_50, %c0_51, %c0_52], %112 {strides = array<i32>} : memref<1x8x32xf32, #tpu.memory_space<vmem>>, vector<1x8x32xf32>,
    return
  }
  func.func @transform_0(%arg0: i32) -> (i32, i32, i32) {
    %c0_i32 = arith.constant 0 : i32
    %c0_i32_0 = arith.constant 0 : i32
    %c0_i32_1 = arith.constant 0 : i32
    return %arg0, %c0_i32, %c0_i32_0 : i32, i32, i32
  }
  func.func @transform_1(%arg0: i32) -> (i32, i32) {
    %c0_i32 = arith.constant 0 : i32
    %c0_i32_0 = arith.constant 0 : i32
    %c0_i32_1 = arith.constant 0 : i32
    return %c0_i32, %c0_i32_0 : i32, i32
  }
  func.func @transform_2(%arg0: i32) -> (i32, i32) {
    %c0_i32 = arith.constant 0 : i32
    %c0_i32_0 = arith.constant 0 : i32
    %c0_i32_1 = arith.constant 0 : i32
    return %c0_i32, %c0_i32_0 : i32, i32
  }
  func.func @transform_3(%arg0: i32) -> (i32, i32) {
    %c0_i32 = arith.constant 0 : i32
    %c0_i32_0 = arith.constant 0 : i32
    %c0_i32_1 = arith.constant 0 : i32
    return %c0_i32, %c0_i32_0 : i32, i32
  }
  func.func @transform_4(%arg0: i32) -> (i32, i32) {
    %c0_i32 = arith.constant 0 : i32
    %c0_i32_0 = arith.constant 0 : i32
    %c0_i32_1 = arith.constant 0 : i32
    return %c0_i32, %c0_i32_0 : i32, i32
  }
  func.func @transform_5(%arg0: i32) -> (i32, i32) {
    %c0_i32 = arith.constant 0 : i32
    %c0_i32_0 = arith.constant 0 : i32
    %c0_i32_1 = arith.constant 0 : i32
    return %c0_i32, %c0_i32_0 : i32, i32
  }
  func.func @transform_6(%arg0: i32) -> (i32, i32) {
    %c0_i32 = arith.constant 0 : i32
    %c0_i32_0 = arith.constant 0 : i32
    %c0_i32_1 = arith.constant 0 : i32
    return %c0_i32, %c0_i32_0 : i32, i32
  }
  func.func @transform_7(%arg0: i32) -> (i32, i32) {
    %c0_i32 = arith.constant 0 : i32
    %c0_i32_0 = arith.constant 0 : i32
    %c0_i32_1 = arith.constant 0 : i32
    return %c0_i32, %c0_i32_0 : i32, i32
  }
  func.func @transform_8(%arg0: i32) -> (i32, i32) {
    %c0_i32 = arith.constant 0 : i32
    %c0_i32_0 = arith.constant 0 : i32
    %c0_i32_1 = arith.constant 0 : i32
    return %c0_i32, %c0_i32_0 : i32, i32
  }
  func.func @transform_9(%arg0: i32) -> (i32, i32) {
    %c0_i32 = arith.constant 0 : i32
    %c0_i32_0 = arith.constant 0 : i32
    %c0_i32_1 = arith.constant 0 : i32
    return %c0_i32, %c0_i32_0 : i32, i32
  }
  func.func @transform_10(%arg0: i32) -> (i32, i32) {
    %c0_i32 = arith.constant 0 : i32
    %c0_i32_0 = arith.constant 0 : i32
    %c0_i32_1 = arith.constant 0 : i32
    return %c0_i32, %c0_i32_0 : i32, i32
  }
  func.func @transform_11(%arg0: i32) -> (i32, i32) {
    %c0_i32 = arith.constant 0 : i32
    %c0_i32_0 = arith.constant 0 : i32
    %c0_i32_1 = arith.constant 0 : i32
    return %c0_i32, %c0_i32_0 : i32, i32
  }
  func.func @transform_12(%arg0: i32) -> (i32, i32) {
    %c0_i32 = arith.constant 0 : i32
    %c0_i32_0 = arith.constant 0 : i32
    %c0_i32_1 = arith.constant 0 : i32
    return %c0_i32, %c0_i32_0 : i32, i32
  }
  func.func @transform_13(%arg0: i32) -> (i32, i32) {
    %c0_i32 = arith.constant 0 : i32
    %c0_i32_0 = arith.constant 0 : i32
    %c0_i32_1 = arith.constant 0 : i32
    return %c0_i32, %c0_i32_0 : i32, i32
  }
  func.func @transform_14(%arg0: i32) -> (i32, i32) {
    %c0_i32 = arith.constant 0 : i32
    %c0_i32_0 = arith.constant 0 : i32
    %c0_i32_1 = arith.constant 0 : i32
    return %c0_i32, %c0_i32_0 : i32, i32
  }
  func.func @transform_15(%arg0: i32) -> (i32, i32, i32) {
    %c0_i32 = arith.constant 0 : i32
    %c0_i32_0 = arith.constant 0 : i32
    %c0_i32_1 = arith.constant 0 : i32
    return %arg0, %c0_i32, %c0_i32_0 : i32, i32, i32
  }
}

</mosaic_0001>

<llo_original>
// kernel: tpu_custom_call.1
$region0: #{tpu_custom_call.1}
  #allocation0 [shape = 'u32[]', space=smem, size = 0x4, offset = 0x4, fixed_abs, tag = 'smem constant byte address 0x4 - core index']
  #allocation1 [shape = 'u32[144,128]{1,0:T(1,128)}', space=vmem, size = 0x12000, scoped, tag = 'internal scratch']
  %s0 = inlined_call_operand.vmem [shape: f32[2,8,32], index: 0, kind: input, shape index: {}]
  %s1 = inlined_call_operand.vmem [shape: f32[1,32], index: 1, kind: input, shape index: {}]
  %s2 = inlined_call_operand.vmem [shape: f32[1,32], index: 2, kind: input, shape index: {}]
  %s3 = inlined_call_operand.vmem [shape: f32[32,96], index: 3, kind: input, shape index: {}]
  %s4 = inlined_call_operand.vmem [shape: f32[1,96], index: 4, kind: input, shape index: {}]
  %s5 = inlined_call_operand.vmem [shape: f32[32,32], index: 5, kind: input, shape index: {}]
  %s6 = inlined_call_operand.vmem [shape: f32[1,32], index: 6, kind: input, shape index: {}]
  %s7 = inlined_call_operand.vmem [shape: f32[1,32], index: 7, kind: input, shape index: {}]
  %s8 = inlined_call_operand.vmem [shape: f32[1,32], index: 8, kind: input, shape index: {}]
  %s9 = inlined_call_operand.vmem [shape: f32[32,128], index: 9, kind: input, shape index: {}]
  %s10 = inlined_call_operand.vmem [shape: f32[1,128], index: 10, kind: input, shape index: {}]
  %s11 = inlined_call_operand.vmem [shape: f32[128,32], index: 11, kind: input, shape index: {}]
  %s12 = inlined_call_operand.vmem [shape: f32[1,32], index: 12, kind: input, shape index: {}]
  %s13 = inlined_call_operand.vmem [shape: f32[1,32], index: 13, kind: input, shape index: {}]
  %s14 = inlined_call_operand.vmem [shape: f32[1,32], index: 14, kind: input, shape index: {}]
  %s15 = inlined_call_operand.hbm [shape: f32[2,8,32], index: 15, kind: output, shape index: {}]
  %s16 = sld [smem:[#allocation0]]
  $region93: #{tpu_custom_call.1} parent=0
    _
  %s18 = ssub.s32 1, %s16
  %s19 = scalar_select 0, %s18, %s16
  $region1: #{tpu_custom_call.1} parent=0
    #allocation2 [shape = 'u8[8192]{0}', space=vmem, size = 0x2000, scoped, tag = 'output window, operand 0']
    #allocation3 [shape = 's32[2]{0}', space=sflag, size = 0x8, scoped, tag = 'scoped memory for tpu_custom_call.1']
    %20 = vsyncpa [#allocation3], 0
    %s21 = scalar_lea.sflag [#allocation3], 1
    %22 = vsyncpa %s21, 0
    loop: start=0, step=1, limit=4
    $region2: #{tpu_custom_call.1} parent=1 // loop_pre_header
      _
    $region3: #{tpu_custom_call.1} parent=1 // loop_header
      %s24 = sphi 0, %s28
      %p25 = scmp.ge.s32.totalorder %s24, 4
      %s34 = sphi 0, %s36
      %s37 = sphi 0, %s34
      %s38 = sphi 0, %s37
      %s54 = sphi 0, %s38
      %s58 = sphi 0, %s58
      %s60 = sphi 0, %s58
      %s61 = sphi 0, %s60
      %s75 = sphi 0, %s61
      %s79 = sphi 0, %s79
      %s81 = sphi 0, %s79
      %s82 = sphi 0, %s81
      %s96 = sphi 0, %s82
      %s100 = sphi 0, %s100
      %s102 = sphi 0, %s100
      %s103 = sphi 0, %s102
      %s117 = sphi 0, %s103
      %s121 = sphi 0, %s121
      %s123 = sphi 0, %s121
      %s124 = sphi 0, %s123
      %s138 = sphi 0, %s124
      %s142 = sphi 0, %s142
      %s144 = sphi 0, %s142
      %s145 = sphi 0, %s144
      %s159 = sphi 0, %s145
      %s163 = sphi 0, %s163
      %s165 = sphi 0, %s163
      %s166 = sphi 0, %s165
      %s180 = sphi 0, %s166
      %s184 = sphi 0, %s184
      %s186 = sphi 0, %s184
      %s187 = sphi 0, %s186
      %s201 = sphi 0, %s187
      %s205 = sphi 0, %s205
      %s207 = sphi 0, %s205
      %s208 = sphi 0, %s207
      %s222 = sphi 0, %s208
      %s226 = sphi 0, %s226
      %s228 = sphi 0, %s226
      %s229 = sphi 0, %s228
      %s243 = sphi 0, %s229
      %s247 = sphi 0, %s247
      %s249 = sphi 0, %s247
      %s250 = sphi 0, %s249
      %s264 = sphi 0, %s250
      %s268 = sphi 0, %s268
      %s270 = sphi 0, %s268
      %s271 = sphi 0, %s270
      %s285 = sphi 0, %s271
      %s289 = sphi 0, %s289
      %s291 = sphi 0, %s289
      %s292 = sphi 0, %s291
      %s306 = sphi 0, %s292
      %s310 = sphi 0, %s310
      %s312 = sphi 0, %s310
      %s313 = sphi 0, %s312
      %s327 = sphi 0, %s313
      %s331 = sphi 0, %s331
      %s333 = sphi 0, %s331
      %s334 = sphi 0, %s333
      %s348 = sphi 0, %s334
      %s354 = sphi 0, %s356
      %s357 = sphi 0, %s354
      %s358 = sphi 0, %s357
      %s374 = sphi 0, %s358
    $region4: #{tpu_custom_call.1} parent=1 // loop_header_branch
      %27 = sbr.rel (%p25) target = $region8
    $region5: #{tpu_custom_call.1} parent=1 // loop_body
      %s29 = ssub.s32 %s24, 1
      %s30 = ssub.s32 %s24, 2
      %s31 = sadd.s32 %s24, 1
      %s32 = ssub.s32 %s24, %s31
      %p33 = scmp.eq.s32.totalorder %s32, 0
      %s35 = sadd.s32 %s34, 1
      %s36 = scalar_select %p33, %s34, %s35
      %p39 = pneg %p33
      %p40 = scmp.eq.s32.totalorder %s24, 1
      %p41 = por %p39, %p40
      %p42 = scmp.ne.s32.totalorder %s34, %s37
      %p43 = scmp.eq.s32.totalorder %s24, 0
      %p44 = por %p42, %p43
      %p45 = scmp.ne.s32.totalorder %s34, %s37
      %p46 = scmp.eq.s32.totalorder %s29, 1
      %p47 = por %p45, %p46
      %p48 = scmp.ne.s32.totalorder %s37, %s38
      %p49 = scmp.eq.s32.totalorder %s29, 0
      %p50 = por %p48, %p49
      %p51 = scmp.ne.s32.totalorder %s37, %s38
      %p52 = scmp.eq.s32.totalorder %s30, 1
      %p53 = por %p51, %p52
      %p55 = scmp.ne.s32.totalorder %s38, %s54
      %p56 = scmp.eq.s32.totalorder %s30, 0
      %p57 = por %p55, %p56
      %s59 = sadd.s32 %s58, 1
      %p62 = scmp.eq.s32.totalorder %s24, 1
      %p63 = scmp.ne.s32.totalorder %s58, %s60
      %p64 = scmp.eq.s32.totalorder %s24, 0
      %p65 = por %p63, %p64
      %p66 = scmp.ne.s32.totalorder %s58, %s60
      %p67 = scmp.eq.s32.totalorder %s29, 1
      %p68 = por %p66, %p67
      %p69 = scmp.ne.s32.totalorder %s60, %s61
      %p70 = scmp.eq.s32.totalorder %s29, 0
      %p71 = por %p69, %p70
      %p72 = scmp.ne.s32.totalorder %s60, %s61
      %p73 = scmp.eq.s32.totalorder %s30, 1
      %p74 = por %p72, %p73
      %p76 = scmp.ne.s32.totalorder %s61, %s75
      %p77 = scmp.eq.s32.totalorder %s30, 0
      %p78 = por %p76, %p77
      %s80 = sadd.s32 %s79, 1
      %p83 = scmp.eq.s32.totalorder %s24, 1
      %p84 = scmp.ne.s32.totalorder %s79, %s81
      %p85 = scmp.eq.s32.totalorder %s24, 0
      %p86 = por %p84, %p85
      %p87 = scmp.ne.s32.totalorder %s79, %s81
      %p88 = scmp.eq.s32.totalorder %s29, 1
      %p89 = por %p87, %p88
      %p90 = scmp.ne.s32.totalorder %s81, %s82
      %p91 = scmp.eq.s32.totalorder %s29, 0
      %p92 = por %p90, %p91
      %p93 = scmp.ne.s32.totalorder %s81, %s82
      %p94 = scmp.eq.s32.totalorder %s30, 1
      %p95 = por %p93, %p94
      %p97 = scmp.ne.s32.totalorder %s82, %s96
      %p98 = scmp.eq.s32.totalorder %s30, 0
      %p99 = por %p97, %p98
      %s101 = sadd.s32 %s100, 1
      %p104 = scmp.eq.s32.totalorder %s24, 1
      %p105 = scmp.ne.s32.totalorder %s100, %s102
      %p106 = scmp.eq.s32.totalorder %s24, 0
      %p107 = por %p105, %p106
      %p108 = scmp.ne.s32.totalorder %s100, %s102
      %p109 = scmp.eq.s32.totalorder %s29, 1
      %p110 = por %p108, %p109
      %p111 = scmp.ne.s32.totalorder %s102, %s103
      %p112 = scmp.eq.s32.totalorder %s29, 0
      %p113 = por %p111, %p112
      %p114 = scmp.ne.s32.totalorder %s102, %s103
      %p115 = scmp.eq.s32.totalorder %s30, 1
      %p116 = por %p114, %p115
      %p118 = scmp.ne.s32.totalorder %s103, %s117
      %p119 = scmp.eq.s32.totalorder %s30, 0
      %p120 = por %p118, %p119
      %s122 = sadd.s32 %s121, 1
      %p125 = scmp.eq.s32.totalorder %s24, 1
      %p126 = scmp.ne.s32.totalorder %s121, %s123
      %p127 = scmp.eq.s32.totalorder %s24, 0
      %p128 = por %p126, %p127
      %p129 = scmp.ne.s32.totalorder %s121, %s123
      %p130 = scmp.eq.s32.totalorder %s29, 1
      %p131 = por %p129, %p130
      %p132 = scmp.ne.s32.totalorder %s123, %s124
      %p133 = scmp.eq.s32.totalorder %s29, 0
      %p134 = por %p132, %p133
      %p135 = scmp.ne.s32.totalorder %s123, %s124
      %p136 = scmp.eq.s32.totalorder %s30, 1
      %p137 = por %p135, %p136
      %p139 = scmp.ne.s32.totalorder %s124, %s138
      %p140 = scmp.eq.s32.totalorder %s30, 0
      %p141 = por %p139, %p140
      %s143 = sadd.s32 %s142, 1
      %p146 = scmp.eq.s32.totalorder %s24, 1
      %p147 = scmp.ne.s32.totalorder %s142, %s144
      %p148 = scmp.eq.s32.totalorder %s24, 0
      %p149 = por %p147, %p148
      %p150 = scmp.ne.s32.totalorder %s142, %s144
      %p151 = scmp.eq.s32.totalorder %s29, 1
      %p152 = por %p150, %p151
      %p153 = scmp.ne.s32.totalorder %s144, %s145
      %p154 = scmp.eq.s32.totalorder %s29, 0
      %p155 = por %p153, %p154
      %p156 = scmp.ne.s32.totalorder %s144, %s145
      %p157 = scmp.eq.s32.totalorder %s30, 1
      %p158 = por %p156, %p157
      %p160 = scmp.ne.s32.totalorder %s145, %s159
      %p161 = scmp.eq.s32.totalorder %s30, 0
      %p162 = por %p160, %p161
      %s164 = sadd.s32 %s163, 1
      %p167 = scmp.eq.s32.totalorder %s24, 1
      %p168 = scmp.ne.s32.totalorder %s163, %s165
      %p169 = scmp.eq.s32.totalorder %s24, 0
      %p170 = por %p168, %p169
      %p171 = scmp.ne.s32.totalorder %s163, %s165
      %p172 = scmp.eq.s32.totalorder %s29, 1
      %p173 = por %p171, %p172
      %p174 = scmp.ne.s32.totalorder %s165, %s166
      %p175 = scmp.eq.s32.totalorder %s29, 0
      %p176 = por %p174, %p175
      %p177 = scmp.ne.s32.totalorder %s165, %s166
      %p178 = scmp.eq.s32.totalorder %s30, 1
      %p179 = por %p177, %p178
      %p181 = scmp.ne.s32.totalorder %s166, %s180
      %p182 = scmp.eq.s32.totalorder %s30, 0
      %p183 = por %p181, %p182
      %s185 = sadd.s32 %s184, 1
      %p188 = scmp.eq.s32.totalorder %s24, 1
      %p189 = scmp.ne.s32.totalorder %s184, %s186
      %p190 = scmp.eq.s32.totalorder %s24, 0
      %p191 = por %p189, %p190
      %p192 = scmp.ne.s32.totalorder %s184, %s186
      %p193 = scmp.eq.s32.totalorder %s29, 1
      %p194 = por %p192, %p193
      %p195 = scmp.ne.s32.totalorder %s186, %s187
      %p196 = scmp.eq.s32.totalorder %s29, 0
      %p197 = por %p195, %p196
      %p198 = scmp.ne.s32.totalorder %s186, %s187
      %p199 = scmp.eq.s32.totalorder %s30, 1
      %p200 = por %p198, %p199
      %p202 = scmp.ne.s32.totalorder %s187, %s201
      %p203 = scmp.eq.s32.totalorder %s30, 0
      %p204 = por %p202, %p203
      %s206 = sadd.s32 %s205, 1
      %p209 = scmp.eq.s32.totalorder %s24, 1
      %p210 = scmp.ne.s32.totalorder %s205, %s207
      %p211 = scmp.eq.s32.totalorder %s24, 0
      %p212 = por %p210, %p211
      %p213 = scmp.ne.s32.totalorder %s205, %s207
      %p214 = scmp.eq.s32.totalorder %s29, 1
      %p215 = por %p213, %p214
      %p216 = scmp.ne.s32.totalorder %s207, %s208
      %p217 = scmp.eq.s32.totalorder %s29, 0
      %p218 = por %p216, %p217
      %p219 = scmp.ne.s32.totalorder %s207, %s208
      %p220 = scmp.eq.s32.totalorder %s30, 1
      %p221 = por %p219, %p220
      %p223 = scmp.ne.s32.totalorder %s208, %s222
      %p224 = scmp.eq.s32.totalorder %s30, 0
      %p225 = por %p223, %p224
      %s227 = sadd.s32 %s226, 1
      %p230 = scmp.eq.s32.totalorder %s24, 1
      %p231 = scmp.ne.s32.totalorder %s226, %s228
      %p232 = scmp.eq.s32.totalorder %s24, 0
      %p233 = por %p231, %p232
      %p234 = scmp.ne.s32.totalorder %s226, %s228
      %p235 = scmp.eq.s32.totalorder %s29, 1
      %p236 = por %p234, %p235
      %p237 = scmp.ne.s32.totalorder %s228, %s229
      %p238 = scmp.eq.s32.totalorder %s29, 0
      %p239 = por %p237, %p238
      %p240 = scmp.ne.s32.totalorder %s228, %s229
      %p241 = scmp.eq.s32.totalorder %s30, 1
      %p242 = por %p240, %p241
      %p244 = scmp.ne.s32.totalorder %s229, %s243
      %p245 = scmp.eq.s32.totalorder %s30, 0
      %p246 = por %p244, %p245
      %s248 = sadd.s32 %s247, 1
      %p251 = scmp.eq.s32.totalorder %s24, 1
      %p252 = scmp.ne.s32.totalorder %s247, %s249
      %p253 = scmp.eq.s32.totalorder %s24, 0
      %p254 = por %p252, %p253
      %p255 = scmp.ne.s32.totalorder %s247, %s249
      %p256 = scmp.eq.s32.totalorder %s29, 1
      %p257 = por %p255, %p256
      %p258 = scmp.ne.s32.totalorder %s249, %s250
      %p259 = scmp.eq.s32.totalorder %s29, 0
      %p260 = por %p258, %p259
      %p261 = scmp.ne.s32.totalorder %s249, %s250
      %p262 = scmp.eq.s32.totalorder %s30, 1
      %p263 = por %p261, %p262
      %p265 = scmp.ne.s32.totalorder %s250, %s264
      %p266 = scmp.eq.s32.totalorder %s30, 0
      %p267 = por %p265, %p266
      %s269 = sadd.s32 %s268, 1
      %p272 = scmp.eq.s32.totalorder %s24, 1
      %p273 = scmp.ne.s32.totalorder %s268, %s270
      %p274 = scmp.eq.s32.totalorder %s24, 0
      %p275 = por %p273, %p274
      %p276 = scmp.ne.s32.totalorder %s268, %s270
      %p277 = scmp.eq.s32.totalorder %s29, 1
      %p278 = por %p276, %p277
      %p279 = scmp.ne.s32.totalorder %s270, %s271
      %p280 = scmp.eq.s32.totalorder %s29, 0
      %p281 = por %p279, %p280
      %p282 = scmp.ne.s32.totalorder %s270, %s271
      %p283 = scmp.eq.s32.totalorder %s30, 1
      %p284 = por %p282, %p283
      %p286 = scmp.ne.s32.totalorder %s271, %s285
      %p287 = scmp.eq.s32.totalorder %s30, 0
      %p288 = por %p286, %p287
      %s290 = sadd.s32 %s289, 1
      %p293 = scmp.eq.s32.totalorder %s24, 1
      %p294 = scmp.ne.s32.totalorder %s289, %s291
      %p295 = scmp.eq.s32.totalorder %s24, 0
      %p296 = por %p294, %p295
      %p297 = scmp.ne.s32.totalorder %s289, %s291
      %p298 = scmp.eq.s32.totalorder %s29, 1
      %p299 = por %p297, %p298
      %p300 = scmp.ne.s32.totalorder %s291, %s292
      %p301 = scmp.eq.s32.totalorder %s29, 0
      %p302 = por %p300, %p301
      %p303 = scmp.ne.s32.totalorder %s291, %s292
      %p304 = scmp.eq.s32.totalorder %s30, 1
      %p305 = por %p303, %p304
      %p307 = scmp.ne.s32.totalorder %s292, %s306
      %p308 = scmp.eq.s32.totalorder %s30, 0
      %p309 = por %p307, %p308
      %s311 = sadd.s32 %s310, 1
      %p314 = scmp.eq.s32.totalorder %s24, 1
      %p315 = scmp.ne.s32.totalorder %s310, %s312
      %p316 = scmp.eq.s32.totalorder %s24, 0
      %p317 = por %p315, %p316
      %p318 = scmp.ne.s32.totalorder %s310, %s312
      %p319 = scmp.eq.s32.totalorder %s29, 1
      %p320 = por %p318, %p319
      %p321 = scmp.ne.s32.totalorder %s312, %s313
      %p322 = scmp.eq.s32.totalorder %s29, 0
      %p323 = por %p321, %p322
      %p324 = scmp.ne.s32.totalorder %s312, %s313
      %p325 = scmp.eq.s32.totalorder %s30, 1
      %p326 = por %p324, %p325
      %p328 = scmp.ne.s32.totalorder %s313, %s327
      %p329 = scmp.eq.s32.totalorder %s30, 0
      %p330 = por %p328, %p329
      %s332 = sadd.s32 %s331, 1
      %p335 = scmp.eq.s32.totalorder %s24, 1
      %p336 = scmp.ne.s32.totalorder %s331, %s333
      %p337 = scmp.eq.s32.totalorder %s24, 0
      %p338 = por %p336, %p337
      %p339 = scmp.ne.s32.totalorder %s331, %s333
      %p340 = scmp.eq.s32.totalorder %s29, 1
      %p341 = por %p339, %p340
      %p342 = scmp.ne.s32.totalorder %s333, %s334
      %p343 = scmp.eq.s32.totalorder %s29, 0
      %p344 = por %p342, %p343
      %p345 = scmp.ne.s32.totalorder %s333, %s334
      %p346 = scmp.eq.s32.totalorder %s30, 1
      %p347 = por %p345, %p346
      %p349 = scmp.ne.s32.totalorder %s334, %s348
      %p350 = scmp.eq.s32.totalorder %s30, 0
      %p351 = por %p349, %p350
      %s352 = ssub.s32 %s24, %s31
      %p353 = scmp.eq.s32.totalorder %s352, 0
      %s355 = sadd.s32 %s354, 1
      %s356 = scalar_select %p353, %s354, %s355
      %p359 = pneg %p353
      %p360 = scmp.eq.s32.totalorder %s24, 1
      %p361 = por %p359, %p360
      %p362 = scmp.ne.s32.totalorder %s354, %s357
      %p363 = scmp.eq.s32.totalorder %s24, 0
      %p364 = por %p362, %p363
      %p365 = scmp.ne.s32.totalorder %s354, %s357
      %p366 = scmp.eq.s32.totalorder %s29, 1
      %p367 = por %p365, %p366
      %p368 = scmp.ne.s32.totalorder %s357, %s358
      %p369 = scmp.eq.s32.totalorder %s29, 0
      %p370 = por %p368, %p369
      %p371 = scmp.ne.s32.totalorder %s357, %s358
      %p372 = scmp.eq.s32.totalorder %s30, 1
      %p373 = por %p371, %p372
      %p375 = scmp.ne.s32.totalorder %s358, %s374
      %p376 = scmp.eq.s32.totalorder %s30, 0
      %p377 = por %p375, %p376
      %p378 = scmp.le.s32.totalorder 1, %s24
      %p379 = scmp.lt.s32.totalorder %s24, 3
      %p380 = pnand %p378, %p379
      %p381 = pneg %p380
      // Predicated region
      $region9: #{tpu_custom_call.1} parent=5 // pred_check
        _
      $region10: #{tpu_custom_call.1} parent=5 // pred_check_branch
        %383 = sbr.rel (%p380) target = $region12
      $region11: #{tpu_custom_call.1} parent=5 // pred_region
        %s384 = ssub.s32 %s24, 1
        // Predicated region
        $region13: #{tpu_custom_call.1} parent=11 // pred_check
          %p385 = pneg %p71
        $region14: #{tpu_custom_call.1} parent=11 // pred_check_branch
          %387 = sbr.rel (%p385) target = $region16
        $region15: #{tpu_custom_call.1} parent=11 // pred_region
          _
        $region16: #{tpu_custom_call.1} parent=11 // pred_fallthru
          _
        // Predicated region
        $region17: #{tpu_custom_call.1} parent=11 // pred_check
          %p388 = pneg %p92
        $region18: #{tpu_custom_call.1} parent=11 // pred_check_branch
          %390 = sbr.rel (%p388) target = $region20
        $region19: #{tpu_custom_call.1} parent=11 // pred_region
          _
        $region20: #{tpu_custom_call.1} parent=11 // pred_fallthru
          _
        // Predicated region
        $region21: #{tpu_custom_call.1} parent=11 // pred_check
          %p391 = pneg %p113
        $region22: #{tpu_custom_call.1} parent=11 // pred_check_branch
          %393 = sbr.rel (%p391) target = $region24
        $region23: #{tpu_custom_call.1} parent=11 // pred_region
          _
        $region24: #{tpu_custom_call.1} parent=11 // pred_fallthru
          _
        // Predicated region
        $region25: #{tpu_custom_call.1} parent=11 // pred_check
          %p394 = pneg %p134
        $region26: #{tpu_custom_call.1} parent=11 // pred_check_branch
          %396 = sbr.rel (%p394) target = $region28
        $region27: #{tpu_custom_call.1} parent=11 // pred_region
          _
        $region28: #{tpu_custom_call.1} parent=11 // pred_fallthru
          _
        // Predicated region
        $region29: #{tpu_custom_call.1} parent=11 // pred_check
          %p397 = pneg %p155
        $region30: #{tpu_custom_call.1} parent=11 // pred_check_branch
          %399 = sbr.rel (%p397) target = $region32
        $region31: #{tpu_custom_call.1} parent=11 // pred_region
          _
        $region32: #{tpu_custom_call.1} parent=11 // pred_fallthru
          _
        // Predicated region
        $region33: #{tpu_custom_call.1} parent=11 // pred_check
          %p400 = pneg %p176
        $region34: #{tpu_custom_call.1} parent=11 // pred_check_branch
          %402 = sbr.rel (%p400) target = $region36
        $region35: #{tpu_custom_call.1} parent=11 // pred_region
          _
        $region36: #{tpu_custom_call.1} parent=11 // pred_fallthru
          _
        // Predicated region
        $region37: #{tpu_custom_call.1} parent=11 // pred_check
          %p403 = pneg %p197
        $region38: #{tpu_custom_call.1} parent=11 // pred_check_branch
          %405 = sbr.rel (%p403) target = $region40
        $region39: #{tpu_custom_call.1} parent=11 // pred_region
          _
        $region40: #{tpu_custom_call.1} parent=11 // pred_fallthru
          _
        // Predicated region
        $region41: #{tpu_custom_call.1} parent=11 // pred_check
          %p406 = pneg %p218
        $region42: #{tpu_custom_call.1} parent=11 // pred_check_branch
          %408 = sbr.rel (%p406) target = $region44
        $region43: #{tpu_custom_call.1} parent=11 // pred_region
          _
        $region44: #{tpu_custom_call.1} parent=11 // pred_fallthru
          _
        // Predicated region
        $region45: #{tpu_custom_call.1} parent=11 // pred_check
          %p409 = pneg %p239
        $region46: #{tpu_custom_call.1} parent=11 // pred_check_branch
          %411 = sbr.rel (%p409) target = $region48
        $region47: #{tpu_custom_call.1} parent=11 // pred_region
          _
        $region48: #{tpu_custom_call.1} parent=11 // pred_fallthru
          _
        // Predicated region
        $region49: #{tpu_custom_call.1} parent=11 // pred_check
          %p412 = pneg %p260
        $region50: #{tpu_custom_call.1} parent=11 // pred_check_branch
          %414 = sbr.rel (%p412) target = $region52
        $region51: #{tpu_custom_call.1} parent=11 // pred_region
          _
        $region52: #{tpu_custom_call.1} parent=11 // pred_fallthru
          _
        // Predicated region
        $region53: #{tpu_custom_call.1} parent=11 // pred_check
          %p415 = pneg %p281
        $region54: #{tpu_custom_call.1} parent=11 // pred_check_branch
          %417 = sbr.rel (%p415) target = $region56
        $region55: #{tpu_custom_call.1} parent=11 // pred_region
          _
        $region56: #{tpu_custom_call.1} parent=11 // pred_fallthru
          _
        // Predicated region
        $region57: #{tpu_custom_call.1} parent=11 // pred_check
          %p418 = pneg %p302
        $region58: #{tpu_custom_call.1} parent=11 // pred_check_branch
          %420 = sbr.rel (%p418) target = $region60
        $region59: #{tpu_custom_call.1} parent=11 // pred_region
          _
        $region60: #{tpu_custom_call.1} parent=11 // pred_fallthru
          _
        // Predicated region
        $region61: #{tpu_custom_call.1} parent=11 // pred_check
          %p421 = pneg %p323
        $region62: #{tpu_custom_call.1} parent=11 // pred_check_branch
          %423 = sbr.rel (%p421) target = $region64
        $region63: #{tpu_custom_call.1} parent=11 // pred_region
          _
        $region64: #{tpu_custom_call.1} parent=11 // pred_fallthru
          _
        // Predicated region
        $region65: #{tpu_custom_call.1} parent=11 // pred_check
          %p424 = pneg %p344
        $region66: #{tpu_custom_call.1} parent=11 // pred_check_branch
          %426 = sbr.rel (%p424) target = $region68
        $region67: #{tpu_custom_call.1} parent=11 // pred_region
          _
        $region68: #{tpu_custom_call.1} parent=11 // pred_fallthru
          _
      $region12: #{tpu_custom_call.1} parent=5 // pred_fallthru
        _
      %p427 = scmp.lt.s32.totalorder %s24, 2
      // Predicated region
      $region69: #{tpu_custom_call.1} parent=5 // pred_check
        %p428 = pneg %p427
      $region70: #{tpu_custom_call.1} parent=5 // pred_check_branch
        %430 = sbr.rel (%p428) target = $region72
      $region71: #{tpu_custom_call.1} parent=5 // pred_region
        // Predicated region
        $region73: #{tpu_custom_call.1} parent=71 // pred_check
          %p431 = pneg %p44
        $region74: #{tpu_custom_call.1} parent=71 // pred_check_branch
          %433 = sbr.rel (%p431) target = $region76
        $region75: #{tpu_custom_call.1} parent=71 // pred_region
          %p434 = scmp.lt.s32.totalorder %s24, 1
          %s435 = scalar_select %p434, %s24, 1
          %s436 = smul.addr %s435, 8
          %s437 = scalar_lea.vmem %s0, %s436
        $region76: #{tpu_custom_call.1} parent=71 // pred_fallthru
          _
      $region72: #{tpu_custom_call.1} parent=5 // pred_fallthru
        _
      %p438 = scmp.le.s32.totalorder 1, %s24
      %p439 = scmp.lt.s32.totalorder %s24, 3
      %p440 = pnand %p438, %p439
      %p441 = pneg %p440
      // Predicated region
      $region77: #{tpu_custom_call.1} parent=5 // pred_check
        _
      $region78: #{tpu_custom_call.1} parent=5 // pred_check_branch
        %443 = sbr.rel (%p440) target = $region80
      $region79: #{tpu_custom_call.1} parent=5 // pred_region
        %s444 = ssub.s32 %s24, 1
        %p445 = scmp.lt.s32.totalorder %s29, 1
        %s446 = scalar_select %p445, %s29, 1
        %s447 = smul.addr %s446, 8
        %s448 = scalar_lea.vmem %s0, %s447
        %p449 = pneg %p50
        %p450 = pneg %p47
        %p451 = pneg %p71
        %p452 = pneg %p68
        %p453 = pneg %p92
        %p454 = pneg %p89
        %p455 = pneg %p113
        %p456 = pneg %p110
        %p457 = pneg %p134
        %p458 = pneg %p131
        %p459 = pneg %p155
        %p460 = pneg %p152
        %p461 = pneg %p176
        %p462 = pneg %p173
        %p463 = pneg %p197
        %p464 = pneg %p194
        %p465 = pneg %p218
        %p466 = pneg %p215
        %p467 = pneg %p239
        %p468 = pneg %p236
        %p469 = pneg %p260
        %p470 = pneg %p257
        %p471 = pneg %p281
        %p472 = pneg %p278
        %p473 = pneg %p302
        %p474 = pneg %p299
        %p475 = pneg %p323
        %p476 = pneg %p320
        %p477 = pneg %p344
        %p478 = pneg %p341
        %p479 = pneg %p370
        %p480 = pneg %p367
        %s481 = sand.u32 %s357, 1
        %s482 = scalar_lea.sflag [#allocation3], %s481
        %s483 = sand.u32 %s357, 1
        %s484 = smul.addr %s483, 8
        %s485 = scalar_lea.vmem [#allocation2], %s484
        %p486 = scmp.lt.s32.totalorder %s29, 1
        %s487 = scalar_select %p486, %s29, 1
        %s488 = smul.addr %s487, 8
        %s489 = scalar_lea.vmem %s0, %s488
        %v490 = vld [vmem:[%s489] sm:$0xff]
        %vm491 = vcmask 261120
        %v492 = vsel %vm491, %v490, 0.0
        %493 = vadd.xlane.f32.xlu0 %v492
        %v494 = vpop.xlane.xlu0 %493
        %v495 = vrcp.pop 32.0
        %v496 = vmul.f32 %v494, %v495
        %v497 = vmul.f32 %v490, %v490
        %v498 = vsel %vm491, %v497, 0.0
        %499 = vadd.xlane.f32.xlu0 %v498
        %v500 = vpop.xlane.xlu0 %499
        %v501 = vmul.f32 %v500, %v495
        %v502 = vmul.f32 %v496, %v496
        %v503 = vsub.f32 %v501, %v502
        %v504 = vsub.f32 %v490, %v496
        %v505 = vadd.f32 %v503, 1e-05
        %v506 = vrsqrt.pop %v505
        %v507 = vmul.f32 %v504, %v506
        %v508 = vld [vmem:[%s1] sm:$0x1]
        %v510 = vlaneseq
        %v511 = vshrl.u32 %v510, 7
        %v512 = vsub.s32 0, %v511
        %v513 = vrot.slane %v508, %v512
        %v515 = vmul.f32 %v507, %v513
        %v516 = vld [vmem:[%s2] sm:$0x1]
        %v518 = vlaneseq
        %v519 = vshrl.u32 %v518, 7
        %v520 = vsub.s32 0, %v519
        %v521 = vrot.slane %v516, %v520
        %v523 = vadd.f32 %v515, %v521
        %v524 = vld [vmem:[%s3] sm:$0xff]
        %v525 = vld [vmem:[%s3 + $0x8] sm:$0xff]
        %v526 = vld [vmem:[%s3 + $0x10] sm:$0xff]
        %v527 = vld [vmem:[%s3 + $0x18] sm:$0xff]
        %v528 = vld [vmem:[%s4] sm:$0x1]
        %v530 = vlaneseq
        %v531 = vshrl.u32 %v530, 7
        %v532 = vsub.s32 0, %v531
        %v533 = vrot.slane %v528, %v532
        %v536 = vsel %vm491, %v523, 0
        %538 = vmatprep.subr.mxu0 0.0
        %539 = vmatpush1.msra.mxu0 %v524
        %540 = vmatprep.subr.mxu0 0.0
        %541 = vmatpush1.msra.mxu0 %v525
        %542 = vmatprep.subr.mxu0 0.0
        %543 = vmatpush1.msra.mxu0 %v526
        %544 = vmatprep.subr.mxu0 0.0
        %545 = vmatpush1.msra.mxu0 %v527
        %546 = vmatprep.subr.mxu0 0.0
        %547 = vmatpush1.msra.mxu0 0.0
        %548 = vmatprep.subr.mxu0 0.0
        %549 = vmatpush1.msra.mxu0 0.0
        %550 = vmatprep.subr.mxu0 0.0
        %551 = vmatpush1.msra.mxu0 0.0
        %552 = vmatprep.subr.mxu0 0.0
        %553 = vmatpush1.msra.mxu0 0.0
        %554 = vmatprep.subr.mxu0 0.0
        %555 = vmatpush1.msra.mxu0 0.0
        %556 = vmatprep.subr.mxu0 0.0
        %557 = vmatpush1.msra.mxu0 0.0
        %558 = vmatprep.subr.mxu0 0.0
        %559 = vmatpush1.msra.mxu0 0.0
        %560 = vmatprep.subr.mxu0 0.0
        %561 = vmatpush1.msra.mxu0 0.0
        %562 = vmatprep.subr.mxu0 0.0
        %563 = vmatpush1.msra.mxu0 0.0
        %564 = vmatprep.subr.mxu0 0.0
        %565 = vmatpush1.msra.mxu0 0.0
        %566 = vmatprep.subr.mxu0 0.0
        %567 = vmatpush1.msra.mxu0 0.0
        %568 = vmatprep.subr.mxu0 0.0
        %569 = vmatpush1.msra.mxu0 0.0
        %570 = vmatprep.subr.mxu0 0.0
        %571 = vmatpush1.msra.mxu0 0.0
        %572 = vmatprep.subr.mxu0 0.0
        %573 = vmatpush1.msra.mxu0 0.0
        %574 = vmatprep.subr.mxu0 0.0
        %575 = vmatpush1.msra.mxu0 0.0
        %576 = vmatprep.subr.mxu0 0.0
        %577 = vmatpush1.msra.mxu0 0.0
        %578 = vmatprep.subr.mxu0 0.0
        %579 = vmatpush1.msra.mxu0 0.0
        %580 = vmatprep.subr.mxu0 0.0
        %581 = vmatpush1.msra.mxu0 0.0
        %582 = vmatprep.subr.mxu0 0.0
        %583 = vmatpush1.msra.mxu0 0.0
        %584 = vmatprep.subr.mxu0 0.0
        %585 = vmatpush1.msra.mxu0 0.0
        %586 = vmatprep.subr.mxu0 0.0
        %587 = vmatpush1.msra.mxu0 0.0
        %588 = vmatprep.subr.mxu0 0.0
        %589 = vmatpush1.msra.mxu0 0.0
        %590 = vmatprep.subr.mxu0 0.0
        %591 = vmatpush1.msra.mxu0 0.0
        %592 = vmatprep.subr.mxu0 0.0
        %593 = vmatpush1.msra.mxu0 0.0
        %594 = vmatprep.subr.mxu0 0.0
        %595 = vmatpush1.msra.mxu0 0.0
        %596 = vmatprep.subr.mxu0 0.0
        %597 = vmatpush1.msra.mxu0 0.0
        %598 = vmatprep.subr.mxu0 0.0
        %599 = vmatpush1.msra.mxu0 0.0
        %600 = vmatprep.subr.mxu0 0.0
        %601 = vmatpush1.msra.mxu0 0.0
        %602 = vmatprep.mubr.f32.mxu0 0.0
        %603 = vmatmul.mubr.f32.gmra.mrb[0].mxu0 %v536
        %v604 = vpop.f32.mrb[0].mxu0
        %v605 = vadd.f32 %v533, %v604
        %v606 = vpop.f32.mrb[0].mxu0
        %607 = vdwg.mxu0
        %609 = vrot.lane.b32.xlu0 %v605, 120
        %v610 = vpop.permute.xlu0 %609
        %612 = vrot.lane.b32.xlu0 %v605, 112
        %v613 = vpop.permute.xlu0 %612
        %615 = vrot.lane.b32.xlu0 %v605, 104
        %v616 = vpop.permute.xlu0 %615
        %v618 = vcombine.low %v605, %v613
        %v619 = vcombine.high %v605, %v613
        %v621 = vunpack.c.l.s4 1983009808
        %v622 = vunpack.c.0.s8 %v621
        %v623 = vlaneseq
        %v624 = vshrl.u32 %v623, 7
        %v625 = vsub.s32 %v622, %v624
        %v626 = vrot.slane %v618, %v625
        %v628 = vunpack.c.l.s4 1983009808
        %v629 = vunpack.c.0.s8 %v628
        %v630 = vlaneseq
        %v631 = vshrl.u32 %v630, 7
        %v632 = vsub.s32 %v629, %v631
        %v633 = vrot.slane %v619, %v632
        %v634 = vcombine.low %v610, %v616
        %v635 = vcombine.high %v610, %v616
        %v637 = vunpack.c.l.s4 1983009808
        %v638 = vunpack.c.0.s8 %v637
        %v639 = vlaneseq
        %v640 = vshrl.u32 %v639, 7
        %v641 = vsub.s32 %v638, %v640
        %v642 = vrot.slane %v634, %v641
        %v644 = vunpack.c.l.s4 1983009808
        %v645 = vunpack.c.0.s8 %v644
        %v646 = vlaneseq
        %v647 = vshrl.u32 %v646, 7
        %v648 = vsub.s32 %v645, %v647
        %v649 = vrot.slane %v635, %v648
        %v650 = vcombine.low %v626, %v642
        %v651 = vcombine.high %v626, %v642
        %v653 = vunpack.c.l.s4 1934713408
        %v654 = vunpack.c.0.s8 %v653
        %v655 = vlaneseq
        %v656 = vshrl.u32 %v655, 7
        %v657 = vsub.s32 %v654, %v656
        %v658 = vrot.slane %v650, %v657
        %v660 = vunpack.c.l.s4 1934713408
        %v661 = vunpack.c.0.s8 %v660
        %v662 = vlaneseq
        %v663 = vshrl.u32 %v662, 7
        %v664 = vsub.s32 %v661, %v663
        %v665 = vrot.slane %v651, %v664
        %v666 = vcombine.low %v633, %v649
        %v667 = vcombine.high %v633, %v649
        %v669 = vunpack.c.l.s4 1934713408
        %v670 = vunpack.c.0.s8 %v669
        %v671 = vlaneseq
        %v672 = vshrl.u32 %v671, 7
        %v673 = vsub.s32 %v670, %v672
        %v674 = vrot.slane %v666, %v673
        %v676 = vunpack.c.l.s4 1934713408
        %v677 = vunpack.c.0.s8 %v676
        %v678 = vlaneseq
        %v679 = vshrl.u32 %v678, 7
        %v680 = vsub.s32 %v677, %v679
        %v681 = vrot.slane %v667, %v680
        %v682 = vcombine.high %v658, 0.0
        %v683 = vcombine.high %v665, 0.0
        %v684 = vcombine.high %v674, 0.0
        %v685 = vcombine.high %v681, 0.0
        %v686 = vcombine.low %v658, %v665
        %v688 = vunpack.c.l.s4 1983009808
        %v689 = vunpack.c.0.s8 %v688
        %v690 = vlaneseq
        %v691 = vshrl.u32 %v690, 7
        %v692 = vsub.s32 %v689, %v691
        %v693 = vrot.slane %v686, %v692
        %v694 = vcombine.low %v682, %v683
        %v696 = vunpack.c.l.s4 1983009808
        %v697 = vunpack.c.0.s8 %v696
        %v698 = vlaneseq
        %v699 = vshrl.u32 %v698, 7
        %v700 = vsub.s32 %v697, %v699
        %v701 = vrot.slane %v694, %v700
        %v702 = vcombine.low %v674, %v681
        %v704 = vunpack.c.l.s4 1983009808
        %v705 = vunpack.c.0.s8 %v704
        %v706 = vlaneseq
        %v707 = vshrl.u32 %v706, 7
        %v708 = vsub.s32 %v705, %v707
        %v709 = vrot.slane %v702, %v708
        %v710 = vcombine.low %v684, %v685
        %v712 = vunpack.c.l.s4 1983009808
        %v713 = vunpack.c.0.s8 %v712
        %v714 = vlaneseq
        %v715 = vshrl.u32 %v714, 7
        %v716 = vsub.s32 %v713, %v715
        %v717 = vrot.slane %v710, %v716
        %v718 = vcombine.low %v693, %v701
        %v719 = vcombine.high %v693, %v701
        %v721 = vunpack.c.l.s4 1934713408
        %v722 = vunpack.c.0.s8 %v721
        %v723 = vlaneseq
        %v724 = vshrl.u32 %v723, 7
        %v725 = vsub.s32 %v722, %v724
        %v726 = vrot.slane %v718, %v725
        %v728 = vunpack.c.l.s4 1934713408
        %v729 = vunpack.c.0.s8 %v728
        %v730 = vlaneseq
        %v731 = vshrl.u32 %v730, 7
        %v732 = vsub.s32 %v729, %v731
        %v733 = vrot.slane %v719, %v732
        %v734 = vcombine.low %v709, %v717
        %v735 = vcombine.high %v709, %v717
        %v737 = vunpack.c.l.s4 1934713408
        %v738 = vunpack.c.0.s8 %v737
        %v739 = vlaneseq
        %v740 = vshrl.u32 %v739, 7
        %v741 = vsub.s32 %v738, %v740
        %v742 = vrot.slane %v734, %v741
        %v744 = vunpack.c.l.s4 1934713408
        %v745 = vunpack.c.0.s8 %v744
        %v746 = vlaneseq
        %v747 = vshrl.u32 %v746, 7
        %v748 = vsub.s32 %v745, %v747
        %v749 = vrot.slane %v735, %v748
        %v750 = vcombine.low %v726, %v742
        %v751 = vcombine.high %v726, %v742
        %v752 = vcombine.low %v733, %v749
        %v753 = vcombine.high %v733, %v749
        %754 = vrot.lane.b32.xlu0 %v605, 96
        %v755 = vpop.permute.xlu0 %754
        %756 = vrot.lane.b32.xlu0 %v610, 96
        %v757 = vpop.permute.xlu0 %756
        %758 = vrot.lane.b32.xlu0 %v613, 96
        %v759 = vpop.permute.xlu0 %758
        %760 = vrot.lane.b32.xlu0 %v616, 96
        %v761 = vpop.permute.xlu0 %760
        %v766 = vcombine.low %v755, %v759
        %v767 = vcombine.high %v755, %v759
        %v769 = vunpack.c.l.s4 1983009808
        %v770 = vunpack.c.0.s8 %v769
        %v771 = vlaneseq
        %v772 = vshrl.u32 %v771, 7
        %v773 = vsub.s32 %v770, %v772
        %v774 = vrot.slane %v766, %v773
        %v776 = vunpack.c.l.s4 1983009808
        %v777 = vunpack.c.0.s8 %v776
        %v778 = vlaneseq
        %v779 = vshrl.u32 %v778, 7
        %v780 = vsub.s32 %v777, %v779
        %v781 = vrot.slane %v767, %v780
        %v782 = vcombine.low %v757, %v761
        %v783 = vcombine.high %v757, %v761
        %v785 = vunpack.c.l.s4 1983009808
        %v786 = vunpack.c.0.s8 %v785
        %v787 = vlaneseq
        %v788 = vshrl.u32 %v787, 7
        %v789 = vsub.s32 %v786, %v788
        %v790 = vrot.slane %v782, %v789
        %v792 = vunpack.c.l.s4 1983009808
        %v793 = vunpack.c.0.s8 %v792
        %v794 = vlaneseq
        %v795 = vshrl.u32 %v794, 7
        %v796 = vsub.s32 %v793, %v795
        %v797 = vrot.slane %v783, %v796
        %v798 = vcombine.low %v774, %v790
        %v799 = vcombine.high %v774, %v790
        %v801 = vunpack.c.l.s4 1934713408
        %v802 = vunpack.c.0.s8 %v801
        %v803 = vlaneseq
        %v804 = vshrl.u32 %v803, 7
        %v805 = vsub.s32 %v802, %v804
        %v806 = vrot.slane %v798, %v805
        %v808 = vunpack.c.l.s4 1934713408
        %v809 = vunpack.c.0.s8 %v808
        %v810 = vlaneseq
        %v811 = vshrl.u32 %v810, 7
        %v812 = vsub.s32 %v809, %v811
        %v813 = vrot.slane %v799, %v812
        %v814 = vcombine.low %v781, %v797
        %v815 = vcombine.high %v781, %v797
        %v817 = vunpack.c.l.s4 1934713408
        %v818 = vunpack.c.0.s8 %v817
        %v819 = vlaneseq
        %v820 = vshrl.u32 %v819, 7
        %v821 = vsub.s32 %v818, %v820
        %v822 = vrot.slane %v814, %v821
        %v824 = vunpack.c.l.s4 1934713408
        %v825 = vunpack.c.0.s8 %v824
        %v826 = vlaneseq
        %v827 = vshrl.u32 %v826, 7
        %v828 = vsub.s32 %v825, %v827
        %v829 = vrot.slane %v815, %v828
        %v830 = vcombine.high %v806, 0.0
        %v831 = vcombine.high %v813, 0.0
        %v832 = vcombine.high %v822, 0.0
        %v833 = vcombine.high %v829, 0.0
        %v834 = vcombine.low %v806, %v813
        %v836 = vunpack.c.l.s4 1983009808
        %v837 = vunpack.c.0.s8 %v836
        %v838 = vlaneseq
        %v839 = vshrl.u32 %v838, 7
        %v840 = vsub.s32 %v837, %v839
        %v841 = vrot.slane %v834, %v840
        %v842 = vcombine.low %v830, %v831
        %v844 = vunpack.c.l.s4 1983009808
        %v845 = vunpack.c.0.s8 %v844
        %v846 = vlaneseq
        %v847 = vshrl.u32 %v846, 7
        %v848 = vsub.s32 %v845, %v847
        %v849 = vrot.slane %v842, %v848
        %v850 = vcombine.low %v822, %v829
        %v852 = vunpack.c.l.s4 1983009808
        %v853 = vunpack.c.0.s8 %v852
        %v854 = vlaneseq
        %v855 = vshrl.u32 %v854, 7
        %v856 = vsub.s32 %v853, %v855
        %v857 = vrot.slane %v850, %v856
        %v858 = vcombine.low %v832, %v833
        %v860 = vunpack.c.l.s4 1983009808
        %v861 = vunpack.c.0.s8 %v860
        %v862 = vlaneseq
        %v863 = vshrl.u32 %v862, 7
        %v864 = vsub.s32 %v861, %v863
        %v865 = vrot.slane %v858, %v864
        %v866 = vcombine.low %v841, %v849
        %v867 = vcombine.high %v841, %v849
        %v869 = vunpack.c.l.s4 1934713408
        %v870 = vunpack.c.0.s8 %v869
        %v871 = vlaneseq
        %v872 = vshrl.u32 %v871, 7
        %v873 = vsub.s32 %v870, %v872
        %v874 = vrot.slane %v866, %v873
        %v876 = vunpack.c.l.s4 1934713408
        %v877 = vunpack.c.0.s8 %v876
        %v878 = vlaneseq
        %v879 = vshrl.u32 %v878, 7
        %v880 = vsub.s32 %v877, %v879
        %v881 = vrot.slane %v867, %v880
        %v882 = vcombine.low %v857, %v865
        %v883 = vcombine.high %v857, %v865
        %v885 = vunpack.c.l.s4 1934713408
        %v886 = vunpack.c.0.s8 %v885
        %v887 = vlaneseq
        %v888 = vshrl.u32 %v887, 7
        %v889 = vsub.s32 %v886, %v888
        %v890 = vrot.slane %v882, %v889
        %v892 = vunpack.c.l.s4 1934713408
        %v893 = vunpack.c.0.s8 %v892
        %v894 = vlaneseq
        %v895 = vshrl.u32 %v894, 7
        %v896 = vsub.s32 %v893, %v895
        %v897 = vrot.slane %v883, %v896
        %v898 = vcombine.low %v874, %v890
        %v899 = vcombine.high %v874, %v890
        %v900 = vcombine.low %v881, %v897
        %v901 = vcombine.high %v881, %v897
        %902 = vrot.lane.b32.xlu0 %v605, 64
        %v903 = vpop.permute.xlu0 %902
        %904 = vrot.lane.b32.xlu0 %v610, 64
        %v905 = vpop.permute.xlu0 %904
        %906 = vrot.lane.b32.xlu0 %v613, 64
        %v907 = vpop.permute.xlu0 %906
        %908 = vrot.lane.b32.xlu0 %v616, 64
        %v909 = vpop.permute.xlu0 %908
        %v914 = vcombine.low %v903, %v907
        %v915 = vcombine.high %v903, %v907
        %v917 = vunpack.c.l.s4 1983009808
        %v918 = vunpack.c.0.s8 %v917
        %v919 = vlaneseq
        %v920 = vshrl.u32 %v919, 7
        %v921 = vsub.s32 %v918, %v920
        %v922 = vrot.slane %v914, %v921
        %v924 = vunpack.c.l.s4 1983009808
        %v925 = vunpack.c.0.s8 %v924
        %v926 = vlaneseq
        %v927 = vshrl.u32 %v926, 7
        %v928 = vsub.s32 %v925, %v927
        %v929 = vrot.slane %v915, %v928
        %v930 = vcombine.low %v905, %v909
        %v931 = vcombine.high %v905, %v909
        %v933 = vunpack.c.l.s4 1983009808
        %v934 = vunpack.c.0.s8 %v933
        %v935 = vlaneseq
        %v936 = vshrl.u32 %v935, 7
        %v937 = vsub.s32 %v934, %v936
        %v938 = vrot.slane %v930, %v937
        %v940 = vunpack.c.l.s4 1983009808
        %v941 = vunpack.c.0.s8 %v940
        %v942 = vlaneseq
        %v943 = vshrl.u32 %v942, 7
        %v944 = vsub.s32 %v941, %v943
        %v945 = vrot.slane %v931, %v944
        %v946 = vcombine.low %v922, %v938
        %v947 = vcombine.high %v922, %v938
        %v949 = vunpack.c.l.s4 1934713408
        %v950 = vunpack.c.0.s8 %v949
        %v951 = vlaneseq
        %v952 = vshrl.u32 %v951, 7
        %v953 = vsub.s32 %v950, %v952
        %v954 = vrot.slane %v946, %v953
        %v956 = vunpack.c.l.s4 1934713408
        %v957 = vunpack.c.0.s8 %v956
        %v958 = vlaneseq
        %v959 = vshrl.u32 %v958, 7
        %v960 = vsub.s32 %v957, %v959
        %v961 = vrot.slane %v947, %v960
        %v962 = vcombine.low %v929, %v945
        %v963 = vcombine.high %v929, %v945
        %v965 = vunpack.c.l.s4 1934713408
        %v966 = vunpack.c.0.s8 %v965
        %v967 = vlaneseq
        %v968 = vshrl.u32 %v967, 7
        %v969 = vsub.s32 %v966, %v968
        %v970 = vrot.slane %v962, %v969
        %v972 = vunpack.c.l.s4 1934713408
        %v973 = vunpack.c.0.s8 %v972
        %v974 = vlaneseq
        %v975 = vshrl.u32 %v974, 7
        %v976 = vsub.s32 %v973, %v975
        %v977 = vrot.slane %v963, %v976
        %v978 = vcombine.high %v954, 0.0
        %v979 = vcombine.high %v961, 0.0
        %v980 = vcombine.high %v970, 0.0
        %v981 = vcombine.high %v977, 0.0
        %v982 = vcombine.low %v954, %v961
        %v984 = vunpack.c.l.s4 1983009808
        %v985 = vunpack.c.0.s8 %v984
        %v986 = vlaneseq
        %v987 = vshrl.u32 %v986, 7
        %v988 = vsub.s32 %v985, %v987
        %v989 = vrot.slane %v982, %v988
        %v990 = vcombine.low %v978, %v979
        %v992 = vunpack.c.l.s4 1983009808
        %v993 = vunpack.c.0.s8 %v992
        %v994 = vlaneseq
        %v995 = vshrl.u32 %v994, 7
        %v996 = vsub.s32 %v993, %v995
        %v997 = vrot.slane %v990, %v996
        %v998 = vcombine.low %v970, %v977
        %v1000 = vunpack.c.l.s4 1983009808
        %v1001 = vunpack.c.0.s8 %v1000
        %v1002 = vlaneseq
        %v1003 = vshrl.u32 %v1002, 7
        %v1004 = vsub.s32 %v1001, %v1003
        %v1005 = vrot.slane %v998, %v1004
        %v1006 = vcombine.low %v980, %v981
        %v1008 = vunpack.c.l.s4 1983009808
        %v1009 = vunpack.c.0.s8 %v1008
        %v1010 = vlaneseq
        %v1011 = vshrl.u32 %v1010, 7
        %v1012 = vsub.s32 %v1009, %v1011
        %v1013 = vrot.slane %v1006, %v1012
        %v1014 = vcombine.low %v989, %v997
        %v1015 = vcombine.high %v989, %v997
        %v1017 = vunpack.c.l.s4 1934713408
        %v1018 = vunpack.c.0.s8 %v1017
        %v1019 = vlaneseq
        %v1020 = vshrl.u32 %v1019, 7
        %v1021 = vsub.s32 %v1018, %v1020
        %v1022 = vrot.slane %v1014, %v1021
        %v1024 = vunpack.c.l.s4 1934713408
        %v1025 = vunpack.c.0.s8 %v1024
        %v1026 = vlaneseq
        %v1027 = vshrl.u32 %v1026, 7
        %v1028 = vsub.s32 %v1025, %v1027
        %v1029 = vrot.slane %v1015, %v1028
        %v1030 = vcombine.low %v1005, %v1013
        %v1031 = vcombine.high %v1005, %v1013
        %v1033 = vunpack.c.l.s4 1934713408
        %v1034 = vunpack.c.0.s8 %v1033
        %v1035 = vlaneseq
        %v1036 = vshrl.u32 %v1035, 7
        %v1037 = vsub.s32 %v1034, %v1036
        %v1038 = vrot.slane %v1030, %v1037
        %v1040 = vunpack.c.l.s4 1934713408
        %v1041 = vunpack.c.0.s8 %v1040
        %v1042 = vlaneseq
        %v1043 = vshrl.u32 %v1042, 7
        %v1044 = vsub.s32 %v1041, %v1043
        %v1045 = vrot.slane %v1031, %v1044
        %v1046 = vcombine.low %v1022, %v1038
        %v1047 = vcombine.high %v1022, %v1038
        %v1048 = vcombine.low %v1029, %v1045
        %v1049 = vcombine.high %v1029, %v1045
        %vm1050 = vcmask 64512
        %v1052 = vsel %vm1050, %v750, 0
        %v1055 = vsel %vm1050, %v898, 0
        %1057 = vmatprep.subr.mxu0 0.0
        %1058 = vmatpush1.xpose.msra.mxu0 %v1055
        %1059 = vmatprep.subr.mxu0 0.0
        %1060 = vmatpush1.xpose.msra.mxu0 0.0
        %1061 = vmatprep.subr.mxu0 0.0
        %1062 = vmatpush1.xpose.msra.mxu0 0.0
        %1063 = vmatprep.subr.mxu0 0.0
        %1064 = vmatpush1.xpose.msra.mxu0 0.0
        %1065 = vmatprep.subr.mxu0 0.0
        %1066 = vmatpush1.xpose.msra.mxu0 0.0
        %1067 = vmatprep.subr.mxu0 0.0
        %1068 = vmatpush1.xpose.msra.mxu0 0.0
        %1069 = vmatprep.subr.mxu0 0.0
        %1070 = vmatpush1.xpose.msra.mxu0 0.0
        %1071 = vmatprep.subr.mxu0 0.0
        %1072 = vmatpush1.xpose.msra.mxu0 0.0
        %1073 = vmatprep.subr.mxu0 0.0
        %1074 = vmatpush1.xpose.msra.mxu0 0.0
        %1075 = vmatprep.subr.mxu0 0.0
        %1076 = vmatpush1.xpose.msra.mxu0 0.0
        %1077 = vmatprep.subr.mxu0 0.0
        %1078 = vmatpush1.xpose.msra.mxu0 0.0
        %1079 = vmatprep.subr.mxu0 0.0
        %1080 = vmatpush1.xpose.msra.mxu0 0.0
        %1081 = vmatprep.subr.mxu0 0.0
        %1082 = vmatpush1.xpose.msra.mxu0 0.0
        %1083 = vmatprep.subr.mxu0 0.0
        %1084 = vmatpush1.xpose.msra.mxu0 0.0
        %1085 = vmatprep.subr.mxu0 0.0
        %1086 = vmatpush1.xpose.msra.mxu0 0.0
        %1087 = vmatprep.subr.mxu0 0.0
        %1088 = vmatpush1.xpose.msra.mxu0 0.0
        %1089 = vmatprep.subr.mxu0 0.0
        %1090 = vmatpush1.xpose.msra.mxu0 0.0
        %1091 = vmatprep.subr.mxu0 0.0
        %1092 = vmatpush1.xpose.msra.mxu0 0.0
        %1093 = vmatprep.subr.mxu0 0.0
        %1094 = vmatpush1.xpose.msra.mxu0 0.0
        %1095 = vmatprep.subr.mxu0 0.0
        %1096 = vmatpush1.xpose.msra.mxu0 0.0
        %1097 = vmatprep.subr.mxu0 0.0
        %1098 = vmatpush1.xpose.msra.mxu0 0.0
        %1099 = vmatprep.subr.mxu0 0.0
        %1100 = vmatpush1.xpose.msra.mxu0 0.0
        %1101 = vmatprep.subr.mxu0 0.0
        %1102 = vmatpush1.xpose.msra.mxu0 0.0
        %1103 = vmatprep.subr.mxu0 0.0
        %1104 = vmatpush1.xpose.msra.mxu0 0.0
        %1105 = vmatprep.subr.mxu0 0.0
        %1106 = vmatpush1.xpose.msra.mxu0 0.0
        %1107 = vmatprep.subr.mxu0 0.0
        %1108 = vmatpush1.xpose.msra.mxu0 0.0
        %1109 = vmatprep.subr.mxu0 0.0
        %1110 = vmatpush1.xpose.msra.mxu0 0.0
        %1111 = vmatprep.subr.mxu0 0.0
        %1112 = vmatpush1.xpose.msra.mxu0 0.0
        %1113 = vmatprep.subr.mxu0 0.0
        %1114 = vmatpush1.xpose.msra.mxu0 0.0
        %1115 = vmatprep.subr.mxu0 0.0
        %1116 = vmatpush1.xpose.msra.mxu0 0.0
        %1117 = vmatprep.subr.mxu0 0.0
        %1118 = vmatpush1.xpose.msra.mxu0 0.0
        %1119 = vmatprep.subr.mxu0 0.0
        %1120 = vmatpush1.xpose.msra.mxu0 0.0
        %1121 = vmatprep.mubr.f32.mxu0 0.0
        %1122 = vmatmul.mubr.f32.gmra.mrb[0].mxu0 %v1052
        %v1123 = vpop.f32.mrb[0].mxu0
        %v1124 = vadd.f32 0.0, %v1123
        %v1125 = vpop.f32.mrb[0].mxu0
        %1126 = vdwg.mxu0
        %v1128 = vsel %vm1050, %v751, 0
        %v1131 = vsel %vm1050, %v899, 0
        %1133 = vmatprep.subr.mxu0 0.0
        %1134 = vmatpush1.xpose.msra.mxu0 %v1131
        %1135 = vmatprep.subr.mxu0 0.0
        %1136 = vmatpush1.xpose.msra.mxu0 0.0
        %1137 = vmatprep.subr.mxu0 0.0
        %1138 = vmatpush1.xpose.msra.mxu0 0.0
        %1139 = vmatprep.subr.mxu0 0.0
        %1140 = vmatpush1.xpose.msra.mxu0 0.0
        %1141 = vmatprep.subr.mxu0 0.0
        %1142 = vmatpush1.xpose.msra.mxu0 0.0
        %1143 = vmatprep.subr.mxu0 0.0
        %1144 = vmatpush1.xpose.msra.mxu0 0.0
        %1145 = vmatprep.subr.mxu0 0.0
        %1146 = vmatpush1.xpose.msra.mxu0 0.0
        %1147 = vmatprep.subr.mxu0 0.0
        %1148 = vmatpush1.xpose.msra.mxu0 0.0
        %1149 = vmatprep.subr.mxu0 0.0
        %1150 = vmatpush1.xpose.msra.mxu0 0.0
        %1151 = vmatprep.subr.mxu0 0.0
        %1152 = vmatpush1.xpose.msra.mxu0 0.0
        %1153 = vmatprep.subr.mxu0 0.0
        %1154 = vmatpush1.xpose.msra.mxu0 0.0
        %1155 = vmatprep.subr.mxu0 0.0
        %1156 = vmatpush1.xpose.msra.mxu0 0.0
        %1157 = vmatprep.subr.mxu0 0.0
        %1158 = vmatpush1.xpose.msra.mxu0 0.0
        %1159 = vmatprep.subr.mxu0 0.0
        %1160 = vmatpush1.xpose.msra.mxu0 0.0
        %1161 = vmatprep.subr.mxu0 0.0
        %1162 = vmatpush1.xpose.msra.mxu0 0.0
        %1163 = vmatprep.subr.mxu0 0.0
        %1164 = vmatpush1.xpose.msra.mxu0 0.0
        %1165 = vmatprep.subr.mxu0 0.0
        %1166 = vmatpush1.xpose.msra.mxu0 0.0
        %1167 = vmatprep.subr.mxu0 0.0
        %1168 = vmatpush1.xpose.msra.mxu0 0.0
        %1169 = vmatprep.subr.mxu0 0.0
        %1170 = vmatpush1.xpose.msra.mxu0 0.0
        %1171 = vmatprep.subr.mxu0 0.0
        %1172 = vmatpush1.xpose.msra.mxu0 0.0
        %1173 = vmatprep.subr.mxu0 0.0
        %1174 = vmatpush1.xpose.msra.mxu0 0.0
        %1175 = vmatprep.subr.mxu0 0.0
        %1176 = vmatpush1.xpose.msra.mxu0 0.0
        %1177 = vmatprep.subr.mxu0 0.0
        %1178 = vmatpush1.xpose.msra.mxu0 0.0
        %1179 = vmatprep.subr.mxu0 0.0
        %1180 = vmatpush1.xpose.msra.mxu0 0.0
        %1181 = vmatprep.subr.mxu0 0.0
        %1182 = vmatpush1.xpose.msra.mxu0 0.0
        %1183 = vmatprep.subr.mxu0 0.0
        %1184 = vmatpush1.xpose.msra.mxu0 0.0
        %1185 = vmatprep.subr.mxu0 0.0
        %1186 = vmatpush1.xpose.msra.mxu0 0.0
        %1187 = vmatprep.subr.mxu0 0.0
        %1188 = vmatpush1.xpose.msra.mxu0 0.0
        %1189 = vmatprep.subr.mxu0 0.0
        %1190 = vmatpush1.xpose.msra.mxu0 0.0
        %1191 = vmatprep.subr.mxu0 0.0
        %1192 = vmatpush1.xpose.msra.mxu0 0.0
        %1193 = vmatprep.subr.mxu0 0.0
        %1194 = vmatpush1.xpose.msra.mxu0 0.0
        %1195 = vmatprep.subr.mxu0 0.0
        %1196 = vmatpush1.xpose.msra.mxu0 0.0
        %1197 = vmatprep.mubr.f32.mxu0 0.0
        %1198 = vmatmul.mubr.f32.gmra.mrb[0].mxu0 %v1128
        %v1199 = vpop.f32.mrb[0].mxu0
        %v1200 = vadd.f32 0.0, %v1199
        %v1201 = vpop.f32.mrb[0].mxu0
        %1202 = vdwg.mxu0
        %v1204 = vsel %vm1050, %v752, 0
        %v1207 = vsel %vm1050, %v900, 0
        %1209 = vmatprep.subr.mxu0 0.0
        %1210 = vmatpush1.xpose.msra.mxu0 %v1207
        %1211 = vmatprep.subr.mxu0 0.0
        %1212 = vmatpush1.xpose.msra.mxu0 0.0
        %1213 = vmatprep.subr.mxu0 0.0
        %1214 = vmatpush1.xpose.msra.mxu0 0.0
        %1215 = vmatprep.subr.mxu0 0.0
        %1216 = vmatpush1.xpose.msra.mxu0 0.0
        %1217 = vmatprep.subr.mxu0 0.0
        %1218 = vmatpush1.xpose.msra.mxu0 0.0
        %1219 = vmatprep.subr.mxu0 0.0
        %1220 = vmatpush1.xpose.msra.mxu0 0.0
        %1221 = vmatprep.subr.mxu0 0.0
        %1222 = vmatpush1.xpose.msra.mxu0 0.0
        %1223 = vmatprep.subr.mxu0 0.0
        %1224 = vmatpush1.xpose.msra.mxu0 0.0
        %1225 = vmatprep.subr.mxu0 0.0
        %1226 = vmatpush1.xpose.msra.mxu0 0.0
        %1227 = vmatprep.subr.mxu0 0.0
        %1228 = vmatpush1.xpose.msra.mxu0 0.0
        %1229 = vmatprep.subr.mxu0 0.0
        %1230 = vmatpush1.xpose.msra.mxu0 0.0
        %1231 = vmatprep.subr.mxu0 0.0
        %1232 = vmatpush1.xpose.msra.mxu0 0.0
        %1233 = vmatprep.subr.mxu0 0.0
        %1234 = vmatpush1.xpose.msra.mxu0 0.0
        %1235 = vmatprep.subr.mxu0 0.0
        %1236 = vmatpush1.xpose.msra.mxu0 0.0
        %1237 = vmatprep.subr.mxu0 0.0
        %1238 = vmatpush1.xpose.msra.mxu0 0.0
        %1239 = vmatprep.subr.mxu0 0.0
        %1240 = vmatpush1.xpose.msra.mxu0 0.0
        %1241 = vmatprep.subr.mxu0 0.0
        %1242 = vmatpush1.xpose.msra.mxu0 0.0
        %1243 = vmatprep.subr.mxu0 0.0
        %1244 = vmatpush1.xpose.msra.mxu0 0.0
        %1245 = vmatprep.subr.mxu0 0.0
        %1246 = vmatpush1.xpose.msra.mxu0 0.0
        %1247 = vmatprep.subr.mxu0 0.0
        %1248 = vmatpush1.xpose.msra.mxu0 0.0
        %1249 = vmatprep.subr.mxu0 0.0
        %1250 = vmatpush1.xpose.msra.mxu0 0.0
        %1251 = vmatprep.subr.mxu0 0.0
        %1252 = vmatpush1.xpose.msra.mxu0 0.0
        %1253 = vmatprep.subr.mxu0 0.0
        %1254 = vmatpush1.xpose.msra.mxu0 0.0
        %1255 = vmatprep.subr.mxu0 0.0
        %1256 = vmatpush1.xpose.msra.mxu0 0.0
        %1257 = vmatprep.subr.mxu0 0.0
        %1258 = vmatpush1.xpose.msra.mxu0 0.0
        %1259 = vmatprep.subr.mxu0 0.0
        %1260 = vmatpush1.xpose.msra.mxu0 0.0
        %1261 = vmatprep.subr.mxu0 0.0
        %1262 = vmatpush1.xpose.msra.mxu0 0.0
        %1263 = vmatprep.subr.mxu0 0.0
        %1264 = vmatpush1.xpose.msra.mxu0 0.0
        %1265 = vmatprep.subr.mxu0 0.0
        %1266 = vmatpush1.xpose.msra.mxu0 0.0
        %1267 = vmatprep.subr.mxu0 0.0
        %1268 = vmatpush1.xpose.msra.mxu0 0.0
        %1269 = vmatprep.subr.mxu0 0.0
        %1270 = vmatpush1.xpose.msra.mxu0 0.0
        %1271 = vmatprep.subr.mxu0 0.0
        %1272 = vmatpush1.xpose.msra.mxu0 0.0
        %1273 = vmatprep.mubr.f32.mxu0 0.0
        %1274 = vmatmul.mubr.f32.gmra.mrb[0].mxu0 %v1204
        %v1275 = vpop.f32.mrb[0].mxu0
        %v1276 = vadd.f32 0.0, %v1275
        %v1277 = vpop.f32.mrb[0].mxu0
        %1278 = vdwg.mxu0
        %v1280 = vsel %vm1050, %v753, 0
        %v1283 = vsel %vm1050, %v901, 0
        %1285 = vmatprep.subr.mxu0 0.0
        %1286 = vmatpush1.xpose.msra.mxu0 %v1283
        %1287 = vmatprep.subr.mxu0 0.0
        %1288 = vmatpush1.xpose.msra.mxu0 0.0
        %1289 = vmatprep.subr.mxu0 0.0
        %1290 = vmatpush1.xpose.msra.mxu0 0.0
        %1291 = vmatprep.subr.mxu0 0.0
        %1292 = vmatpush1.xpose.msra.mxu0 0.0
        %1293 = vmatprep.subr.mxu0 0.0
        %1294 = vmatpush1.xpose.msra.mxu0 0.0
        %1295 = vmatprep.subr.mxu0 0.0
        %1296 = vmatpush1.xpose.msra.mxu0 0.0
        %1297 = vmatprep.subr.mxu0 0.0
        %1298 = vmatpush1.xpose.msra.mxu0 0.0
        %1299 = vmatprep.subr.mxu0 0.0
        %1300 = vmatpush1.xpose.msra.mxu0 0.0
        %1301 = vmatprep.subr.mxu0 0.0
        %1302 = vmatpush1.xpose.msra.mxu0 0.0
        %1303 = vmatprep.subr.mxu0 0.0
        %1304 = vmatpush1.xpose.msra.mxu0 0.0
        %1305 = vmatprep.subr.mxu0 0.0
        %1306 = vmatpush1.xpose.msra.mxu0 0.0
        %1307 = vmatprep.subr.mxu0 0.0
        %1308 = vmatpush1.xpose.msra.mxu0 0.0
        %1309 = vmatprep.subr.mxu0 0.0
        %1310 = vmatpush1.xpose.msra.mxu0 0.0
        %1311 = vmatprep.subr.mxu0 0.0
        %1312 = vmatpush1.xpose.msra.mxu0 0.0
        %1313 = vmatprep.subr.mxu0 0.0
        %1314 = vmatpush1.xpose.msra.mxu0 0.0
        %1315 = vmatprep.subr.mxu0 0.0
        %1316 = vmatpush1.xpose.msra.mxu0 0.0
        %1317 = vmatprep.subr.mxu0 0.0
        %1318 = vmatpush1.xpose.msra.mxu0 0.0
        %1319 = vmatprep.subr.mxu0 0.0
        %1320 = vmatpush1.xpose.msra.mxu0 0.0
        %1321 = vmatprep.subr.mxu0 0.0
        %1322 = vmatpush1.xpose.msra.mxu0 0.0
        %1323 = vmatprep.subr.mxu0 0.0
        %1324 = vmatpush1.xpose.msra.mxu0 0.0
        %1325 = vmatprep.subr.mxu0 0.0
        %1326 = vmatpush1.xpose.msra.mxu0 0.0
        %1327 = vmatprep.subr.mxu0 0.0
        %1328 = vmatpush1.xpose.msra.mxu0 0.0
        %1329 = vmatprep.subr.mxu0 0.0
        %1330 = vmatpush1.xpose.msra.mxu0 0.0
        %1331 = vmatprep.subr.mxu0 0.0
        %1332 = vmatpush1.xpose.msra.mxu0 0.0
        %1333 = vmatprep.subr.mxu0 0.0
        %1334 = vmatpush1.xpose.msra.mxu0 0.0
        %1335 = vmatprep.subr.mxu0 0.0
        %1336 = vmatpush1.xpose.msra.mxu0 0.0
        %1337 = vmatprep.subr.mxu0 0.0
        %1338 = vmatpush1.xpose.msra.mxu0 0.0
        %1339 = vmatprep.subr.mxu0 0.0
        %1340 = vmatpush1.xpose.msra.mxu0 0.0
        %1341 = vmatprep.subr.mxu0 0.0
        %1342 = vmatpush1.xpose.msra.mxu0 0.0
        %1343 = vmatprep.subr.mxu0 0.0
        %1344 = vmatpush1.xpose.msra.mxu0 0.0
        %1345 = vmatprep.subr.mxu0 0.0
        %1346 = vmatpush1.xpose.msra.mxu0 0.0
        %1347 = vmatprep.subr.mxu0 0.0
        %1348 = vmatpush1.xpose.msra.mxu0 0.0
        %1349 = vmatprep.mubr.f32.mxu0 0.0
        %1350 = vmatmul.mubr.f32.gmra.mrb[0].mxu0 %v1280
        %v1351 = vpop.f32.mrb[0].mxu0
        %v1352 = vadd.f32 0.0, %v1351
        %v1353 = vpop.f32.mrb[0].mxu0
        %1354 = vdwg.mxu0
        %v1355 = vsel %vm1050, %v1124, -inf
        %1356 = vmax.xlane.f32.xlu0 %v1355
        %v1357 = vpop.xlane.xlu0 %1356
        %v1358 = vsel %vm1050, %v1200, -inf
        %1359 = vmax.xlane.f32.xlu0 %v1358
        %v1360 = vpop.xlane.xlu0 %1359
        %v1361 = vsel %vm1050, %v1276, -inf
        %1362 = vmax.xlane.f32.xlu0 %v1361
        %v1363 = vpop.xlane.xlu0 %1362
        %v1364 = vsel %vm1050, %v1352, -inf
        %1365 = vmax.xlane.f32.xlu0 %v1364
        %v1366 = vpop.xlane.xlu0 %1365
        %v1367 = vsub.f32 %v1124, %v1357
        %v1368 = vsub.f32 %v1200, %v1360
        %v1369 = vsub.f32 %v1276, %v1363
        %v1370 = vsub.f32 %v1352, %v1366
        %v1371 = vmul.f32 %v1367, 1.442695
        %v1372 = vpow.pop %v1371
        %v1373 = vmul.f32 %v1368, 1.442695
        %v1374 = vpow.pop %v1373
        %v1375 = vmul.f32 %v1369, 1.442695
        %v1376 = vpow.pop %v1375
        %v1377 = vmul.f32 %v1370, 1.442695
        %v1378 = vpow.pop %v1377
        %v1379 = vsel %vm1050, %v1372, 0.0
        %1380 = vadd.xlane.f32.xlu0 %v1379
        %v1381 = vpop.xlane.xlu0 %1380
        %v1382 = vsel %vm1050, %v1374, 0.0
        %1383 = vadd.xlane.f32.xlu0 %v1382
        %v1384 = vpop.xlane.xlu0 %1383
        %v1385 = vsel %vm1050, %v1376, 0.0
        %1386 = vadd.xlane.f32.xlu0 %v1385
        %v1387 = vpop.xlane.xlu0 %1386
        %v1388 = vsel %vm1050, %v1378, 0.0
        %1389 = vadd.xlane.f32.xlu0 %v1388
        %v1390 = vpop.xlane.xlu0 %1389
        %v1392 = vsel %vm1050, %v1372, 0
        %1394 = vmatprep.subr.mxu0 0.0
        %1395 = vmatpush1.msra.mxu0 %v1046
        %1396 = vmatprep.subr.mxu0 0.0
        %1397 = vmatpush1.msra.mxu0 0.0
        %1398 = vmatprep.subr.mxu0 0.0
        %1399 = vmatpush1.msra.mxu0 0.0
        %1400 = vmatprep.subr.mxu0 0.0
        %1401 = vmatpush1.msra.mxu0 0.0
        %1402 = vmatprep.subr.mxu0 0.0
        %1403 = vmatpush1.msra.mxu0 0.0
        %1404 = vmatprep.subr.mxu0 0.0
        %1405 = vmatpush1.msra.mxu0 0.0
        %1406 = vmatprep.subr.mxu0 0.0
        %1407 = vmatpush1.msra.mxu0 0.0
        %1408 = vmatprep.subr.mxu0 0.0
        %1409 = vmatpush1.msra.mxu0 0.0
        %1410 = vmatprep.subr.mxu0 0.0
        %1411 = vmatpush1.msra.mxu0 0.0
        %1412 = vmatprep.subr.mxu0 0.0
        %1413 = vmatpush1.msra.mxu0 0.0
        %1414 = vmatprep.subr.mxu0 0.0
        %1415 = vmatpush1.msra.mxu0 0.0
        %1416 = vmatprep.subr.mxu0 0.0
        %1417 = vmatpush1.msra.mxu0 0.0
        %1418 = vmatprep.subr.mxu0 0.0
        %1419 = vmatpush1.msra.mxu0 0.0
        %1420 = vmatprep.subr.mxu0 0.0
        %1421 = vmatpush1.msra.mxu0 0.0
        %1422 = vmatprep.subr.mxu0 0.0
        %1423 = vmatpush1.msra.mxu0 0.0
        %1424 = vmatprep.subr.mxu0 0.0
        %1425 = vmatpush1.msra.mxu0 0.0
        %1426 = vmatprep.subr.mxu0 0.0
        %1427 = vmatpush1.msra.mxu0 0.0
        %1428 = vmatprep.subr.mxu0 0.0
        %1429 = vmatpush1.msra.mxu0 0.0
        %1430 = vmatprep.subr.mxu0 0.0
        %1431 = vmatpush1.msra.mxu0 0.0
        %1432 = vmatprep.subr.mxu0 0.0
        %1433 = vmatpush1.msra.mxu0 0.0
        %1434 = vmatprep.subr.mxu0 0.0
        %1435 = vmatpush1.msra.mxu0 0.0
        %1436 = vmatprep.subr.mxu0 0.0
        %1437 = vmatpush1.msra.mxu0 0.0
        %1438 = vmatprep.subr.mxu0 0.0
        %1439 = vmatpush1.msra.mxu0 0.0
        %1440 = vmatprep.subr.mxu0 0.0
        %1441 = vmatpush1.msra.mxu0 0.0
        %1442 = vmatprep.subr.mxu0 0.0
        %1443 = vmatpush1.msra.mxu0 0.0
        %1444 = vmatprep.subr.mxu0 0.0
        %1445 = vmatpush1.msra.mxu0 0.0
        %1446 = vmatprep.subr.mxu0 0.0
        %1447 = vmatpush1.msra.mxu0 0.0
        %1448 = vmatprep.subr.mxu0 0.0
        %1449 = vmatpush1.msra.mxu0 0.0
        %1450 = vmatprep.subr.mxu0 0.0
        %1451 = vmatpush1.msra.mxu0 0.0
        %1452 = vmatprep.subr.mxu0 0.0
        %1453 = vmatpush1.msra.mxu0 0.0
        %1454 = vmatprep.subr.mxu0 0.0
        %1455 = vmatpush1.msra.mxu0 0.0
        %1456 = vmatprep.subr.mxu0 0.0
        %1457 = vmatpush1.msra.mxu0 0.0
        %1458 = vmatprep.mubr.f32.mxu0 0.0
        %1459 = vmatmul.mubr.f32.gmra.mrb[0].mxu0 %v1392
        %v1460 = vpop.f32.mrb[0].mxu0
        %v1461 = vadd.f32 0.0, %v1460
        %v1462 = vpop.f32.mrb[0].mxu0
        %1463 = vdwg.mxu0
        %v1465 = vsel %vm1050, %v1374, 0
        %1467 = vmatprep.subr.mxu0 0.0
        %1468 = vmatpush1.msra.mxu0 %v1047
        %1469 = vmatprep.subr.mxu0 0.0
        %1470 = vmatpush1.msra.mxu0 0.0
        %1471 = vmatprep.subr.mxu0 0.0
        %1472 = vmatpush1.msra.mxu0 0.0
        %1473 = vmatprep.subr.mxu0 0.0
        %1474 = vmatpush1.msra.mxu0 0.0
        %1475 = vmatprep.subr.mxu0 0.0
        %1476 = vmatpush1.msra.mxu0 0.0
        %1477 = vmatprep.subr.mxu0 0.0
        %1478 = vmatpush1.msra.mxu0 0.0
        %1479 = vmatprep.subr.mxu0 0.0
        %1480 = vmatpush1.msra.mxu0 0.0
        %1481 = vmatprep.subr.mxu0 0.0
        %1482 = vmatpush1.msra.mxu0 0.0
        %1483 = vmatprep.subr.mxu0 0.0
        %1484 = vmatpush1.msra.mxu0 0.0
        %1485 = vmatprep.subr.mxu0 0.0
        %1486 = vmatpush1.msra.mxu0 0.0
        %1487 = vmatprep.subr.mxu0 0.0
        %1488 = vmatpush1.msra.mxu0 0.0
        %1489 = vmatprep.subr.mxu0 0.0
        %1490 = vmatpush1.msra.mxu0 0.0
        %1491 = vmatprep.subr.mxu0 0.0
        %1492 = vmatpush1.msra.mxu0 0.0
        %1493 = vmatprep.subr.mxu0 0.0
        %1494 = vmatpush1.msra.mxu0 0.0
        %1495 = vmatprep.subr.mxu0 0.0
        %1496 = vmatpush1.msra.mxu0 0.0
        %1497 = vmatprep.subr.mxu0 0.0
        %1498 = vmatpush1.msra.mxu0 0.0
        %1499 = vmatprep.subr.mxu0 0.0
        %1500 = vmatpush1.msra.mxu0 0.0
        %1501 = vmatprep.subr.mxu0 0.0
        %1502 = vmatpush1.msra.mxu0 0.0
        %1503 = vmatprep.subr.mxu0 0.0
        %1504 = vmatpush1.msra.mxu0 0.0
        %1505 = vmatprep.subr.mxu0 0.0
        %1506 = vmatpush1.msra.mxu0 0.0
        %1507 = vmatprep.subr.mxu0 0.0
        %1508 = vmatpush1.msra.mxu0 0.0
        %1509 = vmatprep.subr.mxu0 0.0
        %1510 = vmatpush1.msra.mxu0 0.0
        %1511 = vmatprep.subr.mxu0 0.0
        %1512 = vmatpush1.msra.mxu0 0.0
        %1513 = vmatprep.subr.mxu0 0.0
        %1514 = vmatpush1.msra.mxu0 0.0
        %1515 = vmatprep.subr.mxu0 0.0
        %1516 = vmatpush1.msra.mxu0 0.0
        %1517 = vmatprep.subr.mxu0 0.0
        %1518 = vmatpush1.msra.mxu0 0.0
        %1519 = vmatprep.subr.mxu0 0.0
        %1520 = vmatpush1.msra.mxu0 0.0
        %1521 = vmatprep.subr.mxu0 0.0
        %1522 = vmatpush1.msra.mxu0 0.0
        %1523 = vmatprep.subr.mxu0 0.0
        %1524 = vmatpush1.msra.mxu0 0.0
        %1525 = vmatprep.subr.mxu0 0.0
        %1526 = vmatpush1.msra.mxu0 0.0
        %1527 = vmatprep.subr.mxu0 0.0
        %1528 = vmatpush1.msra.mxu0 0.0
        %1529 = vmatprep.subr.mxu0 0.0
        %1530 = vmatpush1.msra.mxu0 0.0
        %1531 = vmatprep.mubr.f32.mxu0 0.0
        %1532 = vmatmul.mubr.f32.gmra.mrb[0].mxu0 %v1465
        %v1533 = vpop.f32.mrb[0].mxu0
        %v1534 = vadd.f32 0.0, %v1533
        %v1535 = vpop.f32.mrb[0].mxu0
        %1536 = vdwg.mxu0
        %v1538 = vsel %vm1050, %v1376, 0
        %1540 = vmatprep.subr.mxu0 0.0
        %1541 = vmatpush1.msra.mxu0 %v1048
        %1542 = vmatprep.subr.mxu0 0.0
        %1543 = vmatpush1.msra.mxu0 0.0
        %1544 = vmatprep.subr.mxu0 0.0
        %1545 = vmatpush1.msra.mxu0 0.0
        %1546 = vmatprep.subr.mxu0 0.0
        %1547 = vmatpush1.msra.mxu0 0.0
        %1548 = vmatprep.subr.mxu0 0.0
        %1549 = vmatpush1.msra.mxu0 0.0
        %1550 = vmatprep.subr.mxu0 0.0
        %1551 = vmatpush1.msra.mxu0 0.0
        %1552 = vmatprep.subr.mxu0 0.0
        %1553 = vmatpush1.msra.mxu0 0.0
        %1554 = vmatprep.subr.mxu0 0.0
        %1555 = vmatpush1.msra.mxu0 0.0
        %1556 = vmatprep.subr.mxu0 0.0
        %1557 = vmatpush1.msra.mxu0 0.0
        %1558 = vmatprep.subr.mxu0 0.0
        %1559 = vmatpush1.msra.mxu0 0.0
        %1560 = vmatprep.subr.mxu0 0.0
        %1561 = vmatpush1.msra.mxu0 0.0
        %1562 = vmatprep.subr.mxu0 0.0
        %1563 = vmatpush1.msra.mxu0 0.0
        %1564 = vmatprep.subr.mxu0 0.0
        %1565 = vmatpush1.msra.mxu0 0.0
        %1566 = vmatprep.subr.mxu0 0.0
        %1567 = vmatpush1.msra.mxu0 0.0
        %1568 = vmatprep.subr.mxu0 0.0
        %1569 = vmatpush1.msra.mxu0 0.0
        %1570 = vmatprep.subr.mxu0 0.0
        %1571 = vmatpush1.msra.mxu0 0.0
        %1572 = vmatprep.subr.mxu0 0.0
        %1573 = vmatpush1.msra.mxu0 0.0
        %1574 = vmatprep.subr.mxu0 0.0
        %1575 = vmatpush1.msra.mxu0 0.0
        %1576 = vmatprep.subr.mxu0 0.0
        %1577 = vmatpush1.msra.mxu0 0.0
        %1578 = vmatprep.subr.mxu0 0.0
        %1579 = vmatpush1.msra.mxu0 0.0
        %1580 = vmatprep.subr.mxu0 0.0
        %1581 = vmatpush1.msra.mxu0 0.0
        %1582 = vmatprep.subr.mxu0 0.0
        %1583 = vmatpush1.msra.mxu0 0.0
        %1584 = vmatprep.subr.mxu0 0.0
        %1585 = vmatpush1.msra.mxu0 0.0
        %1586 = vmatprep.subr.mxu0 0.0
        %1587 = vmatpush1.msra.mxu0 0.0
        %1588 = vmatprep.subr.mxu0 0.0
        %1589 = vmatpush1.msra.mxu0 0.0
        %1590 = vmatprep.subr.mxu0 0.0
        %1591 = vmatpush1.msra.mxu0 0.0
        %1592 = vmatprep.subr.mxu0 0.0
        %1593 = vmatpush1.msra.mxu0 0.0
        %1594 = vmatprep.subr.mxu0 0.0
        %1595 = vmatpush1.msra.mxu0 0.0
        %1596 = vmatprep.subr.mxu0 0.0
        %1597 = vmatpush1.msra.mxu0 0.0
        %1598 = vmatprep.subr.mxu0 0.0
        %1599 = vmatpush1.msra.mxu0 0.0
        %1600 = vmatprep.subr.mxu0 0.0
        %1601 = vmatpush1.msra.mxu0 0.0
        %1602 = vmatprep.subr.mxu0 0.0
        %1603 = vmatpush1.msra.mxu0 0.0
        %1604 = vmatprep.mubr.f32.mxu0 0.0
        %1605 = vmatmul.mubr.f32.gmra.mrb[0].mxu0 %v1538
        %v1606 = vpop.f32.mrb[0].mxu0
        %v1607 = vadd.f32 0.0, %v1606
        %v1608 = vpop.f32.mrb[0].mxu0
        %1609 = vdwg.mxu0
        %v1611 = vsel %vm1050, %v1378, 0
        %1613 = vmatprep.subr.mxu0 0.0
        %1614 = vmatpush1.msra.mxu0 %v1049
        %1615 = vmatprep.subr.mxu0 0.0
        %1616 = vmatpush1.msra.mxu0 0.0
        %1617 = vmatprep.subr.mxu0 0.0
        %1618 = vmatpush1.msra.mxu0 0.0
        %1619 = vmatprep.subr.mxu0 0.0
        %1620 = vmatpush1.msra.mxu0 0.0
        %1621 = vmatprep.subr.mxu0 0.0
        %1622 = vmatpush1.msra.mxu0 0.0
        %1623 = vmatprep.subr.mxu0 0.0
        %1624 = vmatpush1.msra.mxu0 0.0
        %1625 = vmatprep.subr.mxu0 0.0
        %1626 = vmatpush1.msra.mxu0 0.0
        %1627 = vmatprep.subr.mxu0 0.0
        %1628 = vmatpush1.msra.mxu0 0.0
        %1629 = vmatprep.subr.mxu0 0.0
        %1630 = vmatpush1.msra.mxu0 0.0
        %1631 = vmatprep.subr.mxu0 0.0
        %1632 = vmatpush1.msra.mxu0 0.0
        %1633 = vmatprep.subr.mxu0 0.0
        %1634 = vmatpush1.msra.mxu0 0.0
        %1635 = vmatprep.subr.mxu0 0.0
        %1636 = vmatpush1.msra.mxu0 0.0
        %1637 = vmatprep.subr.mxu0 0.0
        %1638 = vmatpush1.msra.mxu0 0.0
        %1639 = vmatprep.subr.mxu0 0.0
        %1640 = vmatpush1.msra.mxu0 0.0
        %1641 = vmatprep.subr.mxu0 0.0
        %1642 = vmatpush1.msra.mxu0 0.0
        %1643 = vmatprep.subr.mxu0 0.0
        %1644 = vmatpush1.msra.mxu0 0.0
        %1645 = vmatprep.subr.mxu0 0.0
        %1646 = vmatpush1.msra.mxu0 0.0
        %1647 = vmatprep.subr.mxu0 0.0
        %1648 = vmatpush1.msra.mxu0 0.0
        %1649 = vmatprep.subr.mxu0 0.0
        %1650 = vmatpush1.msra.mxu0 0.0
        %1651 = vmatprep.subr.mxu0 0.0
        %1652 = vmatpush1.msra.mxu0 0.0
        %1653 = vmatprep.subr.mxu0 0.0
        %1654 = vmatpush1.msra.mxu0 0.0
        %1655 = vmatprep.subr.mxu0 0.0
        %1656 = vmatpush1.msra.mxu0 0.0
        %1657 = vmatprep.subr.mxu0 0.0
        %1658 = vmatpush1.msra.mxu0 0.0
        %1659 = vmatprep.subr.mxu0 0.0
        %1660 = vmatpush1.msra.mxu0 0.0
        %1661 = vmatprep.subr.mxu0 0.0
        %1662 = vmatpush1.msra.mxu0 0.0
        %1663 = vmatprep.subr.mxu0 0.0
        %1664 = vmatpush1.msra.mxu0 0.0
        %1665 = vmatprep.subr.mxu0 0.0
        %1666 = vmatpush1.msra.mxu0 0.0
        %1667 = vmatprep.subr.mxu0 0.0
        %1668 = vmatpush1.msra.mxu0 0.0
        %1669 = vmatprep.subr.mxu0 0.0
        %1670 = vmatpush1.msra.mxu0 0.0
        %1671 = vmatprep.subr.mxu0 0.0
        %1672 = vmatpush1.msra.mxu0 0.0
        %1673 = vmatprep.subr.mxu0 0.0
        %1674 = vmatpush1.msra.mxu0 0.0
        %1675 = vmatprep.subr.mxu0 0.0
        %1676 = vmatpush1.msra.mxu0 0.0
        %1677 = vmatprep.mubr.f32.mxu0 0.0
        %1678 = vmatmul.mubr.f32.gmra.mrb[0].mxu0 %v1611
        %v1679 = vpop.f32.mrb[0].mxu0
        %v1680 = vadd.f32 0.0, %v1679
        %v1681 = vpop.f32.mrb[0].mxu0
        %1682 = vdwg.mxu0
        %v1683 = vrcp.pop %v1381
        %v1684 = vmul.f32 %v1461, %v1683
        %v1685 = vrcp.pop %v1384
        %v1686 = vmul.f32 %v1534, %v1685
        %v1687 = vrcp.pop %v1387
        %v1688 = vmul.f32 %v1607, %v1687
        %v1689 = vrcp.pop %v1390
        %v1690 = vmul.f32 %v1680, %v1689
        %v1691 = vcombine.low %v1684, %v1688
        %v1692 = vcombine.high %v1684, %v1688
        %v1694 = vunpack.c.l.s4 1983009808
        %v1695 = vunpack.c.0.s8 %v1694
        %v1696 = vlaneseq
        %v1697 = vshrl.u32 %v1696, 7
        %v1698 = vsub.s32 %v1695, %v1697
        %v1699 = vrot.slane %v1691, %v1698
        %v1701 = vunpack.c.l.s4 1983009808
        %v1702 = vunpack.c.0.s8 %v1701
        %v1703 = vlaneseq
        %v1704 = vshrl.u32 %v1703, 7
        %v1705 = vsub.s32 %v1702, %v1704
        %v1706 = vrot.slane %v1692, %v1705
        %v1707 = vcombine.low %v1686, %v1690
        %v1708 = vcombine.high %v1686, %v1690
        %v1710 = vunpack.c.l.s4 1983009808
        %v1711 = vunpack.c.0.s8 %v1710
        %v1712 = vlaneseq
        %v1713 = vshrl.u32 %v1712, 7
        %v1714 = vsub.s32 %v1711, %v1713
        %v1715 = vrot.slane %v1707, %v1714
        %v1717 = vunpack.c.l.s4 1983009808
        %v1718 = vunpack.c.0.s8 %v1717
        %v1719 = vlaneseq
        %v1720 = vshrl.u32 %v1719, 7
        %v1721 = vsub.s32 %v1718, %v1720
        %v1722 = vrot.slane %v1708, %v1721
        %v1723 = vcombine.low %v1699, %v1715
        %v1724 = vcombine.high %v1699, %v1715
        %v1726 = vunpack.c.l.s4 1934713408
        %v1727 = vunpack.c.0.s8 %v1726
        %v1728 = vlaneseq
        %v1729 = vshrl.u32 %v1728, 7
        %v1730 = vsub.s32 %v1727, %v1729
        %v1731 = vrot.slane %v1723, %v1730
        %v1733 = vunpack.c.l.s4 1934713408
        %v1734 = vunpack.c.0.s8 %v1733
        %v1735 = vlaneseq
        %v1736 = vshrl.u32 %v1735, 7
        %v1737 = vsub.s32 %v1734, %v1736
        %v1738 = vrot.slane %v1724, %v1737
        %v1739 = vcombine.low %v1706, %v1722
        %v1740 = vcombine.high %v1706, %v1722
        %v1742 = vunpack.c.l.s4 1934713408
        %v1743 = vunpack.c.0.s8 %v1742
        %v1744 = vlaneseq
        %v1745 = vshrl.u32 %v1744, 7
        %v1746 = vsub.s32 %v1743, %v1745
        %v1747 = vrot.slane %v1739, %v1746
        %v1749 = vunpack.c.l.s4 1934713408
        %v1750 = vunpack.c.0.s8 %v1749
        %v1751 = vlaneseq
        %v1752 = vshrl.u32 %v1751, 7
        %v1753 = vsub.s32 %v1750, %v1752
        %v1754 = vrot.slane %v1740, %v1753
        %v1755 = vcombine.high %v1731, 0.0
        %v1756 = vcombine.high %v1738, 0.0
        %v1757 = vcombine.high %v1747, 0.0
        %v1758 = vcombine.high %v1754, 0.0
        %v1759 = vcombine.low %v1731, %v1738
        %v1761 = vunpack.c.l.s4 1983009808
        %v1762 = vunpack.c.0.s8 %v1761
        %v1763 = vlaneseq
        %v1764 = vshrl.u32 %v1763, 7
        %v1765 = vsub.s32 %v1762, %v1764
        %v1766 = vrot.slane %v1759, %v1765
        %v1767 = vcombine.low %v1755, %v1756
        %v1769 = vunpack.c.l.s4 1983009808
        %v1770 = vunpack.c.0.s8 %v1769
        %v1771 = vlaneseq
        %v1772 = vshrl.u32 %v1771, 7
        %v1773 = vsub.s32 %v1770, %v1772
        %v1774 = vrot.slane %v1767, %v1773
        %v1775 = vcombine.low %v1747, %v1754
        %v1777 = vunpack.c.l.s4 1983009808
        %v1778 = vunpack.c.0.s8 %v1777
        %v1779 = vlaneseq
        %v1780 = vshrl.u32 %v1779, 7
        %v1781 = vsub.s32 %v1778, %v1780
        %v1782 = vrot.slane %v1775, %v1781
        %v1783 = vcombine.low %v1757, %v1758
        %v1785 = vunpack.c.l.s4 1983009808
        %v1786 = vunpack.c.0.s8 %v1785
        %v1787 = vlaneseq
        %v1788 = vshrl.u32 %v1787, 7
        %v1789 = vsub.s32 %v1786, %v1788
        %v1790 = vrot.slane %v1783, %v1789
        %v1791 = vcombine.low %v1766, %v1774
        %v1792 = vcombine.high %v1766, %v1774
        %v1794 = vunpack.c.l.s4 1934713408
        %v1795 = vunpack.c.0.s8 %v1794
        %v1796 = vlaneseq
        %v1797 = vshrl.u32 %v1796, 7
        %v1798 = vsub.s32 %v1795, %v1797
        %v1799 = vrot.slane %v1791, %v1798
        %v1801 = vunpack.c.l.s4 1934713408
        %v1802 = vunpack.c.0.s8 %v1801
        %v1803 = vlaneseq
        %v1804 = vshrl.u32 %v1803, 7
        %v1805 = vsub.s32 %v1802, %v1804
        %v1806 = vrot.slane %v1792, %v1805
        %v1807 = vcombine.low %v1782, %v1790
        %v1808 = vcombine.high %v1782, %v1790
        %v1810 = vunpack.c.l.s4 1934713408
        %v1811 = vunpack.c.0.s8 %v1810
        %v1812 = vlaneseq
        %v1813 = vshrl.u32 %v1812, 7
        %v1814 = vsub.s32 %v1811, %v1813
        %v1815 = vrot.slane %v1807, %v1814
        %v1817 = vunpack.c.l.s4 1934713408
        %v1818 = vunpack.c.0.s8 %v1817
        %v1819 = vlaneseq
        %v1820 = vshrl.u32 %v1819, 7
        %v1821 = vsub.s32 %v1818, %v1820
        %v1822 = vrot.slane %v1808, %v1821
        %v1823 = vcombine.low %v1799, %v1815
        %v1824 = vcombine.high %v1799, %v1815
        %v1825 = vcombine.low %v1806, %v1822
        %v1826 = vcombine.high %v1806, %v1822
        %1828 = vrot.lane.b32.xlu0 %v1824, 8
        %v1829 = vpop.permute.xlu0 %1828
        %1832 = vrot.lane.b32.xlu0 %v1825, 16
        %v1833 = vpop.permute.xlu0 %1832
        %1836 = vrot.lane.b32.xlu0 %v1826, 24
        %v1837 = vpop.permute.xlu0 %1836
        %v1839 = vsel %vm1050, %v1823, %v1829
        %vm1840 = vcmask 130048
        %v1841 = vsel %vm1840, %v1839, %v1833
        %vm1842 = vcmask 195584
        %v1843 = vsel %vm1842, %v1841, %v1837
        %v1844 = vld [vmem:[%s13] sm:$0x1]
        %v1845 = vld [vmem:[%s5] sm:$0xff]
        %v1846 = vld [vmem:[%s5 + $0x8] sm:$0xff]
        %v1847 = vld [vmem:[%s5 + $0x10] sm:$0xff]
        %v1848 = vld [vmem:[%s5 + $0x18] sm:$0xff]
        %v1849 = vld [vmem:[%s6] sm:$0x1]
        %v1851 = vlaneseq
        %v1852 = vshrl.u32 %v1851, 7
        %v1853 = vsub.s32 0, %v1852
        %v1854 = vrot.slane %v1849, %v1853
        %v1857 = vsel %vm491, %v1843, 0
        %1859 = vmatprep.subr.mxu0 0.0
        %1860 = vmatpush1.msra.mxu0 %v1845
        %1861 = vmatprep.subr.mxu0 0.0
        %1862 = vmatpush1.msra.mxu0 %v1846
        %1863 = vmatprep.subr.mxu0 0.0
        %1864 = vmatpush1.msra.mxu0 %v1847
        %1865 = vmatprep.subr.mxu0 0.0
        %1866 = vmatpush1.msra.mxu0 %v1848
        %1867 = vmatprep.subr.mxu0 0.0
        %1868 = vmatpush1.msra.mxu0 0.0
        %1869 = vmatprep.subr.mxu0 0.0
        %1870 = vmatpush1.msra.mxu0 0.0
        %1871 = vmatprep.subr.mxu0 0.0
        %1872 = vmatpush1.msra.mxu0 0.0
        %1873 = vmatprep.subr.mxu0 0.0
        %1874 = vmatpush1.msra.mxu0 0.0
        %1875 = vmatprep.subr.mxu0 0.0
        %1876 = vmatpush1.msra.mxu0 0.0
        %1877 = vmatprep.subr.mxu0 0.0
        %1878 = vmatpush1.msra.mxu0 0.0
        %1879 = vmatprep.subr.mxu0 0.0
        %1880 = vmatpush1.msra.mxu0 0.0
        %1881 = vmatprep.subr.mxu0 0.0
        %1882 = vmatpush1.msra.mxu0 0.0
        %1883 = vmatprep.subr.mxu0 0.0
        %1884 = vmatpush1.msra.mxu0 0.0
        %1885 = vmatprep.subr.mxu0 0.0
        %1886 = vmatpush1.msra.mxu0 0.0
        %1887 = vmatprep.subr.mxu0 0.0
        %1888 = vmatpush1.msra.mxu0 0.0
        %1889 = vmatprep.subr.mxu0 0.0
        %1890 = vmatpush1.msra.mxu0 0.0
        %1891 = vmatprep.subr.mxu0 0.0
        %1892 = vmatpush1.msra.mxu0 0.0
        %1893 = vmatprep.subr.mxu0 0.0
        %1894 = vmatpush1.msra.mxu0 0.0
        %1895 = vmatprep.subr.mxu0 0.0
        %1896 = vmatpush1.msra.mxu0 0.0
        %1897 = vmatprep.subr.mxu0 0.0
        %1898 = vmatpush1.msra.mxu0 0.0
        %1899 = vmatprep.subr.mxu0 0.0
        %1900 = vmatpush1.msra.mxu0 0.0
        %1901 = vmatprep.subr.mxu0 0.0
        %1902 = vmatpush1.msra.mxu0 0.0
        %1903 = vmatprep.subr.mxu0 0.0
        %1904 = vmatpush1.msra.mxu0 0.0
        %1905 = vmatprep.subr.mxu0 0.0
        %1906 = vmatpush1.msra.mxu0 0.0
        %1907 = vmatprep.subr.mxu0 0.0
        %1908 = vmatpush1.msra.mxu0 0.0
        %1909 = vmatprep.subr.mxu0 0.0
        %1910 = vmatpush1.msra.mxu0 0.0
        %1911 = vmatprep.subr.mxu0 0.0
        %1912 = vmatpush1.msra.mxu0 0.0
        %1913 = vmatprep.subr.mxu0 0.0
        %1914 = vmatpush1.msra.mxu0 0.0
        %1915 = vmatprep.subr.mxu0 0.0
        %1916 = vmatpush1.msra.mxu0 0.0
        %1917 = vmatprep.subr.mxu0 0.0
        %1918 = vmatpush1.msra.mxu0 0.0
        %1919 = vmatprep.subr.mxu0 0.0
        %1920 = vmatpush1.msra.mxu0 0.0
        %1921 = vmatprep.subr.mxu0 0.0
        %1922 = vmatpush1.msra.mxu0 0.0
        %1923 = vmatprep.mubr.f32.mxu0 0.0
        %1924 = vmatmul.mubr.f32.gmra.mrb[0].mxu0 %v1857
        %v1925 = vpop.f32.mrb[0].mxu0
        %v1926 = vadd.f32 %v1854, %v1925
        %v1927 = vpop.f32.mrb[0].mxu0
        %1928 = vdwg.mxu0
        %v1930 = vlaneseq
        %v1931 = vshrl.u32 %v1930, 7
        %v1932 = vsub.s32 0, %v1931
        %v1933 = vrot.slane %v1844, %v1932
        %v1935 = vmul.f32 %v1933, %v1926
        %v1936 = vadd.f32 %v490, %v1935
        %v1937 = vsel %vm491, %v1936, 0.0
        %1938 = vadd.xlane.f32.xlu0 %v1937
        %v1939 = vpop.xlane.xlu0 %1938
        %v1940 = vmul.f32 %v1939, %v495
        %v1941 = vmul.f32 %v1936, %v1936
        %v1942 = vsel %vm491, %v1941, 0.0
        %1943 = vadd.xlane.f32.xlu0 %v1942
        %v1944 = vpop.xlane.xlu0 %1943
        %v1945 = vmul.f32 %v1944, %v495
        %v1946 = vmul.f32 %v1940, %v1940
        %v1947 = vsub.f32 %v1945, %v1946
        %v1948 = vsub.f32 %v1936, %v1940
        %v1949 = vadd.f32 %v1947, 1e-05
        %v1950 = vrsqrt.pop %v1949
        %v1951 = vmul.f32 %v1948, %v1950
        %v1952 = vld [vmem:[%s7] sm:$0x1]
        %v1954 = vlaneseq
        %v1955 = vshrl.u32 %v1954, 7
        %v1956 = vsub.s32 0, %v1955
        %v1957 = vrot.slane %v1952, %v1956
        %v1959 = vmul.f32 %v1951, %v1957
        %v1960 = vld [vmem:[%s8] sm:$0x1]
        %v1962 = vlaneseq
        %v1963 = vshrl.u32 %v1962, 7
        %v1964 = vsub.s32 0, %v1963
        %v1965 = vrot.slane %v1960, %v1964
        %v1967 = vadd.f32 %v1959, %v1965
        %v1968 = vld [vmem:[%s9] sm:$0xff]
        %v1969 = vld [vmem:[%s9 + $0x8] sm:$0xff]
        %v1970 = vld [vmem:[%s9 + $0x10] sm:$0xff]
        %v1971 = vld [vmem:[%s9 + $0x18] sm:$0xff]
        %v1972 = vld [vmem:[%s10] sm:$0x1]
        %v1974 = vlaneseq
        %v1975 = vshrl.u32 %v1974, 7
        %v1976 = vsub.s32 0, %v1975
        %v1977 = vrot.slane %v1972, %v1976
        %v1980 = vsel %vm491, %v1967, 0
        %1982 = vmatprep.subr.mxu0 0.0
        %1983 = vmatpush1.msra.mxu0 %v1968
        %1984 = vmatprep.subr.mxu0 0.0
        %1985 = vmatpush1.msra.mxu0 %v1969
        %1986 = vmatprep.subr.mxu0 0.0
        %1987 = vmatpush1.msra.mxu0 %v1970
        %1988 = vmatprep.subr.mxu0 0.0
        %1989 = vmatpush1.msra.mxu0 %v1971
        %1990 = vmatprep.subr.mxu0 0.0
        %1991 = vmatpush1.msra.mxu0 0.0
        %1992 = vmatprep.subr.mxu0 0.0
        %1993 = vmatpush1.msra.mxu0 0.0
        %1994 = vmatprep.subr.mxu0 0.0
        %1995 = vmatpush1.msra.mxu0 0.0
        %1996 = vmatprep.subr.mxu0 0.0
        %1997 = vmatpush1.msra.mxu0 0.0
        %1998 = vmatprep.subr.mxu0 0.0
        %1999 = vmatpush1.msra.mxu0 0.0
        %2000 = vmatprep.subr.mxu0 0.0
        %2001 = vmatpush1.msra.mxu0 0.0
        %2002 = vmatprep.subr.mxu0 0.0
        %2003 = vmatpush1.msra.mxu0 0.0
        %2004 = vmatprep.subr.mxu0 0.0
        %2005 = vmatpush1.msra.mxu0 0.0
        %2006 = vmatprep.subr.mxu0 0.0
        %2007 = vmatpush1.msra.mxu0 0.0
        %2008 = vmatprep.subr.mxu0 0.0
        %2009 = vmatpush1.msra.mxu0 0.0
        %2010 = vmatprep.subr.mxu0 0.0
        %2011 = vmatpush1.msra.mxu0 0.0
        %2012 = vmatprep.subr.mxu0 0.0
        %2013 = vmatpush1.msra.mxu0 0.0
        %2014 = vmatprep.subr.mxu0 0.0
        %2015 = vmatpush1.msra.mxu0 0.0
        %2016 = vmatprep.subr.mxu0 0.0
        %2017 = vmatpush1.msra.mxu0 0.0
        %2018 = vmatprep.subr.mxu0 0.0
        %2019 = vmatpush1.msra.mxu0 0.0
        %2020 = vmatprep.subr.mxu0 0.0
        %2021 = vmatpush1.msra.mxu0 0.0
        %2022 = vmatprep.subr.mxu0 0.0
        %2023 = vmatpush1.msra.mxu0 0.0
        %2024 = vmatprep.subr.mxu0 0.0
        %2025 = vmatpush1.msra.mxu0 0.0
        %2026 = vmatprep.subr.mxu0 0.0
        %2027 = vmatpush1.msra.mxu0 0.0
        %2028 = vmatprep.subr.mxu0 0.0
        %2029 = vmatpush1.msra.mxu0 0.0
        %2030 = vmatprep.subr.mxu0 0.0
        %2031 = vmatpush1.msra.mxu0 0.0
        %2032 = vmatprep.subr.mxu0 0.0
        %2033 = vmatpush1.msra.mxu0 0.0
        %2034 = vmatprep.subr.mxu0 0.0
        %2035 = vmatpush1.msra.mxu0 0.0
        %2036 = vmatprep.subr.mxu0 0.0
        %2037 = vmatpush1.msra.mxu0 0.0
        %2038 = vmatprep.subr.mxu0 0.0
        %2039 = vmatpush1.msra.mxu0 0.0
        %2040 = vmatprep.subr.mxu0 0.0
        %2041 = vmatpush1.msra.mxu0 0.0
        %2042 = vmatprep.subr.mxu0 0.0
        %2043 = vmatpush1.msra.mxu0 0.0
        %2044 = vmatprep.subr.mxu0 0.0
        %2045 = vmatpush1.msra.mxu0 0.0
        %2046 = vmatprep.mubr.f32.mxu0 0.0
        %2047 = vmatmul.mubr.f32.gmra.mrb[0].mxu0 %v1980
        %v2048 = vpop.f32.mrb[0].mxu0
        %v2049 = vadd.f32 %v1977, %v2048
        %v2050 = vpop.f32.mrb[0].mxu0
        %2051 = vdwg.mxu0
        %v2052 = vmul.f32 %v2049, 0.5
        %v2053 = vmul.f32 %v2049, 0.70710677
        %v2054 = verf.f32.pop %v2053
        %v2055 = vadd.f32 %v2054, 1.0
        %v2056 = vmul.f32 %v2052, %v2055
        %v2057 = vld [vmem:[%s11] sm:$0xff]
        %v2058 = vld [vmem:[%s11 + $0x8] sm:$0xff]
        %v2059 = vld [vmem:[%s11 + $0x10] sm:$0xff]
        %v2060 = vld [vmem:[%s11 + $0x18] sm:$0xff]
        %v2061 = vld [vmem:[%s11 + $0x20] sm:$0xff]
        %v2062 = vld [vmem:[%s11 + $0x28] sm:$0xff]
        %v2063 = vld [vmem:[%s11 + $0x30] sm:$0xff]
        %v2064 = vld [vmem:[%s11 + $0x38] sm:$0xff]
        %v2065 = vld [vmem:[%s11 + $0x40] sm:$0xff]
        %v2066 = vld [vmem:[%s11 + $0x48] sm:$0xff]
        %v2067 = vld [vmem:[%s11 + $0x50] sm:$0xff]
        %v2068 = vld [vmem:[%s11 + $0x58] sm:$0xff]
        %v2069 = vld [vmem:[%s11 + $0x60] sm:$0xff]
        %v2070 = vld [vmem:[%s11 + $0x68] sm:$0xff]
        %v2071 = vld [vmem:[%s11 + $0x70] sm:$0xff]
        %v2072 = vld [vmem:[%s11 + $0x78] sm:$0xff]
        %v2073 = vld [vmem:[%s12] sm:$0x1]
        %v2075 = vlaneseq
        %v2076 = vshrl.u32 %v2075, 7
        %v2077 = vsub.s32 0, %v2076
        %v2078 = vrot.slane %v2073, %v2077
        %2080 = vmatprep.subr.mxu0 0.0
        %2081 = vmatpush1.msra.mxu0 %v2057
        %2082 = vmatprep.subr.mxu0 0.0
        %2083 = vmatpush1.msra.mxu0 %v2058
        %2084 = vmatprep.subr.mxu0 0.0
        %2085 = vmatpush1.msra.mxu0 %v2059
        %2086 = vmatprep.subr.mxu0 0.0
        %2087 = vmatpush1.msra.mxu0 %v2060
        %2088 = vmatprep.subr.mxu0 0.0
        %2089 = vmatpush1.msra.mxu0 %v2061
        %2090 = vmatprep.subr.mxu0 0.0
        %2091 = vmatpush1.msra.mxu0 %v2062
        %2092 = vmatprep.subr.mxu0 0.0
        %2093 = vmatpush1.msra.mxu0 %v2063
        %2094 = vmatprep.subr.mxu0 0.0
        %2095 = vmatpush1.msra.mxu0 %v2064
        %2096 = vmatprep.subr.mxu0 0.0
        %2097 = vmatpush1.msra.mxu0 %v2065
        %2098 = vmatprep.subr.mxu0 0.0
        %2099 = vmatpush1.msra.mxu0 %v2066
        %2100 = vmatprep.subr.mxu0 0.0
        %2101 = vmatpush1.msra.mxu0 %v2067
        %2102 = vmatprep.subr.mxu0 0.0
        %2103 = vmatpush1.msra.mxu0 %v2068
        %2104 = vmatprep.subr.mxu0 0.0
        %2105 = vmatpush1.msra.mxu0 %v2069
        %2106 = vmatprep.subr.mxu0 0.0
        %2107 = vmatpush1.msra.mxu0 %v2070
        %2108 = vmatprep.subr.mxu0 0.0
        %2109 = vmatpush1.msra.mxu0 %v2071
        %2110 = vmatprep.subr.mxu0 0.0
        %2111 = vmatpush1.msra.mxu0 %v2072
        %2112 = vmatprep.subr.mxu0 0.0
        %2113 = vmatpush1.msra.mxu0 0.0
        %2114 = vmatprep.subr.mxu0 0.0
        %2115 = vmatpush1.msra.mxu0 0.0
        %2116 = vmatprep.subr.mxu0 0.0
        %2117 = vmatpush1.msra.mxu0 0.0
        %2118 = vmatprep.subr.mxu0 0.0
        %2119 = vmatpush1.msra.mxu0 0.0
        %2120 = vmatprep.subr.mxu0 0.0
        %2121 = vmatpush1.msra.mxu0 0.0
        %2122 = vmatprep.subr.mxu0 0.0
        %2123 = vmatpush1.msra.mxu0 0.0
        %2124 = vmatprep.subr.mxu0 0.0
        %2125 = vmatpush1.msra.mxu0 0.0
        %2126 = vmatprep.subr.mxu0 0.0
        %2127 = vmatpush1.msra.mxu0 0.0
        %2128 = vmatprep.subr.mxu0 0.0
        %2129 = vmatpush1.msra.mxu0 0.0
        %2130 = vmatprep.subr.mxu0 0.0
        %2131 = vmatpush1.msra.mxu0 0.0
        %2132 = vmatprep.subr.mxu0 0.0
        %2133 = vmatpush1.msra.mxu0 0.0
        %2134 = vmatprep.subr.mxu0 0.0
        %2135 = vmatpush1.msra.mxu0 0.0
        %2136 = vmatprep.subr.mxu0 0.0
        %2137 = vmatpush1.msra.mxu0 0.0
        %2138 = vmatprep.subr.mxu0 0.0
        %2139 = vmatpush1.msra.mxu0 0.0
        %2140 = vmatprep.subr.mxu0 0.0
        %2141 = vmatpush1.msra.mxu0 0.0
        %2142 = vmatprep.subr.mxu0 0.0
        %2143 = vmatpush1.msra.mxu0 0.0
        %2144 = vmatprep.mubr.f32.mxu0 0.0
        %2145 = vmatmul.mubr.f32.gmra.mrb[0].mxu0 %v2056
        %v2146 = vpop.f32.mrb[0].mxu0
        %v2147 = vadd.f32 %v2078, %v2146
        %v2148 = vpop.f32.mrb[0].mxu0
        %2149 = vdwg.mxu0
        %v2150 = vld [vmem:[%s14] sm:$0x1]
        %v2152 = vlaneseq
        %v2153 = vshrl.u32 %v2152, 7
        %v2154 = vsub.s32 0, %v2153
        %v2155 = vrot.slane %v2150, %v2154
        %v2157 = vmul.f32 %v2155, %v2147
        %v2158 = vadd.f32 %v1936, %v2157
        %2159 = vst.msk [vmem:[%s485] sm:$0xff] %vm491, %v2158
        %s2160 = sand.u32 %s357, 1
        %s2161 = scalar_lea.sflag [#allocation3], %s2160
        %s2162 = sand.u32 %s357, 1
        %s2163 = smul.addr %s2162, 8
        %s2164 = scalar_lea.vmem [#allocation2], %s2163
        // Predicated region
        $region81: #{tpu_custom_call.1} parent=79 // pred_check
          %p2165 = pneg %p367
        $region82: #{tpu_custom_call.1} parent=79 // pred_check_branch
          %2167 = sbr.rel (%p2165) target = $region84
        $region83: #{tpu_custom_call.1} parent=79 // pred_region
          %s2169 = ssub.s32 128, 128
          %2170 = vsyncadd %s2161, %s2169
          %s2171 = smul.addr %s29, 128
          %s2172 = scalar_lea.hbm %s15, %s2171
          %s2174 = sshll.u32 %s2164, 4
          %s2175 = int_to_ptr.vmem [resolvable:$true] %s2174
          %2177 = dma.vmem_to_hbm [thread:$0]  %s2175, 128, %s2172, %s2161
        $region84: #{tpu_custom_call.1} parent=79 // pred_fallthru
          _
      $region80: #{tpu_custom_call.1} parent=5 // pred_fallthru
        _
      %p2178 = scmp.le.s32.totalorder 2, %s24
      // Predicated region
      $region85: #{tpu_custom_call.1} parent=5 // pred_check
        %p2179 = pneg %p2178
      $region86: #{tpu_custom_call.1} parent=5 // pred_check_branch
        %2181 = sbr.rel (%p2179) target = $region88
      $region87: #{tpu_custom_call.1} parent=5 // pred_region
        %s2182 = ssub.s32 %s24, 2
        // Predicated region
        $region89: #{tpu_custom_call.1} parent=87 // pred_check
          %p2183 = pneg %p373
        $region90: #{tpu_custom_call.1} parent=87 // pred_check_branch
          %2185 = sbr.rel (%p2183) target = $region92
        $region91: #{tpu_custom_call.1} parent=87 // pred_region
          %s2186 = sand.u32 %s358, 1
          %s2187 = scalar_lea.sflag [#allocation3], %s2186
          %s2188 = sand.u32 %s358, 1
          %s2189 = smul.addr %s2188, 8
          %s2190 = scalar_lea.vmem [#allocation2], %s2189
          %2191 = dma.done %s2187, 128
        $region92: #{tpu_custom_call.1} parent=87 // pred_fallthru
          _
      $region88: #{tpu_custom_call.1} parent=5 // pred_fallthru
        _
    $region6: #{tpu_custom_call.1} parent=1 // loop_footer
      %s28 = sadd.s32 1, %s24
    $region7: #{tpu_custom_call.1} parent=1 // loop_footer_branch
      %23 = sbr.rel target = $region3
    $region8: #{tpu_custom_call.1} parent=1 // loop_exit
      _
    %2192 = vsyncpa [#allocation3], 1
    %s2193 = scalar_lea.sflag [#allocation3], 1
    %2194 = vsyncpa %s2193, 1

</llo_original>
